<compile_context>
chip_gen: v5e
topology: v5e:2x2
jax: 0.10.0
libtpu: 0.0.40
codegen_flags: <defaults>
</compile_context>

<pallas_src>
import functools

import numpy as np
import jax
import jax.numpy as jnp
from jax import lax
from jax.experimental import pallas as pl
from jax.experimental.pallas import tpu as pltpu


def _res_conv_block_kernel(xp_ref, w_ref, b_ref, gnw_ref, gnb_ref, pa_ref,
                           out_ref, *, ks, pad, gn_groups, same_channels,
                           vpu_conv):
    """One batch sample: xp (Cin, L+2*pad) -> out (Cout, L), NCL layout."""
    Cout, L = out_ref.shape
    Cin = xp_ref.shape[0]
    G = gn_groups
    Cg = Cout // G

    xp = xp_ref[...]                                   # (Cin, L + 2*pad) f32
    a = pa_ref[0]                                      # PReLU slope (SMEM)

    # ---- conv1d (stride=1) as `ks` shifted channel contractions ----------
    acc = jnp.broadcast_to(b_ref[...], (Cout, L))      # start from the bias
    if vpu_conv:
        # Tiny Cin: (Cout,1)x(1,L) broadcast-FMA per (tap, channel) on the
        # VPU; skips MXU push/pop latency for a nearly-empty systolic array.
        for k in range(ks):
            wk = w_ref[k]                              # (Cout, Cin)
            xs = xp[:, k:k + L]                        # (Cin, L)
            for c in range(Cin):
                acc = acc + wk[:, c:c + 1] * xs[c:c + 1, :]
    else:
        # Larger Cin: MXU matmul per tap, f32 accumulation.
        # (bf16 inputs would be a further v6e/v7x win at large C; kept f32.)
        for k in range(ks):
            acc = acc + jnp.dot(w_ref[k], xp[:, k:k + L],
                                preferred_element_type=jnp.float32)

    # ---- GroupNorm(G) + PReLU + residual, fused per contiguous group -----
    # G is a small static hyperparameter; sublane slices + full reductions
    # avoid reshape/one-hot-matmul round trips entirely.
    inv_n = 1.0 / float(Cg * L)
    for g in range(G):
        lo, hi = g * Cg, (g + 1) * Cg
        yg = acc[lo:hi, :]                             # (Cg, L)
        m = jnp.sum(yg) * inv_n                        # group mean
        d = yg - m
        v = jnp.sum(d * d) * inv_n                     # biased group variance
        # normalization + affine folded into one FMA pass
        scale = lax.rsqrt(v + 1e-5) * gnw_ref[lo:hi, :]         # (Cg, 1)
        yn = d * scale + gnb_ref[lo:hi, :]                      # (Cg, L)
        yp = jnp.maximum(yn, 0.0) + a * jnp.minimum(yn, 0.0)    # PReLU
        if same_channels:
            yp = (xp[lo:hi, pad:pad + L] + yp) * 0.5            # residual avg
        out_ref[lo:hi, :] = yp


def residual_conv_block(x, params, *, gn=8, stride=1):
    """x: (B, Cin, L) float32, PyTorch NCL layout -> (B, Cout, Lout)."""
    w, b, gnw, gnb, pa = params
    if stride != 1:
        # TODO(synk): strided conv not implemented; module default stride=1.
        raise NotImplementedError("stride != 1 not supported")
    B, Cin, L = x.shape
    Cout, Cin_w, ks = w.shape
    assert Cin_w == Cin
    assert Cout % gn == 0
    pad = (ks - 1) // 2                       # get_padding(ks, dilation=1)
    Lout = L + 2 * pad - ks + 1
    Lp = L + 2 * pad
    same_channels = (Cin == Cout)
    if same_channels:
        assert Lout == L, "residual path needs odd kernel_size (as in torch)"

    # Hoisted weight standardization (grid-invariant; eps=1e-5, biased var).
    wm = jnp.mean(w, axis=(1, 2), keepdims=True)
    wv = jnp.mean((w - wm) ** 2, axis=(1, 2), keepdims=True)
    nw = (w - wm) * lax.rsqrt(wv + 1e-5)
    nw_t = jnp.transpose(nw, (2, 0, 1))       # (ks, Cout, Cin): w_ref[k] = tap

    xpad = jnp.pad(x, ((0, 0), (0, 0), (pad, pad)))   # zero pad along L

    kernel = functools.partial(
        _res_conv_block_kernel,
        ks=ks, pad=pad, gn_groups=gn, same_channels=same_channels,
        vpu_conv=(Cin <= 8))

    return pl.pallas_call(
        kernel,
        out_shape=jax.ShapeDtypeStruct((B, Cout, Lout), jnp.float32),
        grid=(B,),
        in_specs=[
            # one sample per grid step (leading batch dim squeezed)
            pl.BlockSpec((None, Cin, Lp), lambda bi: (bi, 0, 0)),
            # grid-invariant parameters (block index constant -> fetched once)
            pl.BlockSpec((ks, Cout, Cin), lambda bi: (0, 0, 0)),
            pl.BlockSpec((Cout, 1), lambda bi: (0, 0)),
            pl.BlockSpec((Cout, 1), lambda bi: (0, 0)),
            pl.BlockSpec((Cout, 1), lambda bi: (0, 0)),
            # PReLU shared slope: SMEM scalar, not a padded (8,128) VMEM tile
            pl.BlockSpec(memory_space=pltpu.MemorySpace.SMEM),
        ],
        out_specs=pl.BlockSpec((None, Cout, Lout), lambda bi: (bi, 0, 0)),
        compiler_params=pltpu.CompilerParams(
            dimension_semantics=("parallel",),       # shard batch across TCs
            vmem_limit_bytes=32 * 1024 * 1024),
    )(xpad, nw_t,
      b.reshape(Cout, 1), gnw.reshape(Cout, 1), gnb.reshape(Cout, 1),
      pa.reshape(1))


def init_params(key, inc, outc, ks):
    """Deterministic synthetic parameters matching the module's __init__."""
    kw, kb, kg, kh = jax.random.split(key, 4)
    w = jax.random.normal(kw, (outc, inc, ks), jnp.float32) * 0.1
    b = jax.random.normal(kb, (outc,), jnp.float32) * 0.05
    gnw = 1.0 + 0.1 * jax.random.normal(kg, (outc,), jnp.float32)
    gnb = 0.05 * jax.random.normal(kh, (outc,), jnp.float32)
    pa = jnp.full((1,), 0.25, jnp.float32)    # PReLU default init
    return (w, b, gnw, gnb, pa)


# ---------------- pure-JAX reference (mirrors the PyTorch forward) ----------
def _ref_block(x, params, gn=8, stride=1):
    w, b, gnw, gnb, pa = params
    eps = 1e-5
    wm = w.mean(axis=(1, 2), keepdims=True)
    wv = ((w - wm) ** 2).mean(axis=(1, 2), keepdims=True)
    nw = (w - wm) / jnp.sqrt(wv + eps)
    ks = w.shape[2]
    pad = (ks - 1) // 2
    y = lax.conv_general_dilated(x, nw, window_strides=(stride,),
                                 padding=[(pad, pad)],
                                 dimension_numbers=('NCH', 'OIH', 'NCH'))
    y = y + b[None, :, None]
    B, C, L = y.shape
    yg = y.reshape(B, gn, C // gn, L)
    m = yg.mean(axis=(2, 3), keepdims=True)
    v = ((yg - m) ** 2).mean(axis=(2, 3), keepdims=True)
    yn = ((yg - m) / jnp.sqrt(v + 1e-5)).reshape(B, C, L)
    yn = yn * gnw[None, :, None] + gnb[None, :, None]
    yp = jnp.maximum(yn, 0.0) + pa[0] * jnp.minimum(yn, 0.0)
    if x.shape[1] == C:
        return (x + yp) / 2
    return yp


if __name__ == "__main__":
    B, L, ks, gn = 2, 16, 3, 8
    key = jax.random.PRNGKey(0)
    kx, ka, kb = jax.random.split(key, 3)
    x0 = jax.random.normal(kx, (B, 4, L), jnp.float32)
    params_a = init_params(ka, 4, 32, ks)    # inc != outc: no residual, VPU conv
    params_b = init_params(kb, 32, 32, ks)   # inc == outc: residual, MXU conv

    y1 = residual_conv_block(x0, params_a, gn=gn)
    y2 = residual_conv_block(y1, params_b, gn=gn)
    jax.block_until_ready(y2)

    r1 = _ref_block(x0, params_a, gn=gn)
    r2 = _ref_block(r1, params_b, gn=gn)
    np.testing.assert_allclose(np.asarray(y1), np.asarray(r1),
                               rtol=1e-3, atol=1e-3)
    np.testing.assert_allclose(np.asarray(y2), np.asarray(r2),
                               rtol=1e-3, atol=1e-3)
    print("KERNEL_OK")
</pallas_src>

<mosaic_0001>
module attributes {stable_mosaic.version = 11 : i64} {
  func.func @_res_conv_block_kernel(%arg0: i32, %arg1: memref<1x4x18xf32, #tpu.memory_space<vmem>>, %arg2: memref<3x32x4xf32, #tpu.memory_space<vmem>>, %arg3: memref<32x1xf32, #tpu.memory_space<vmem>>, %arg4: memref<32x1xf32, #tpu.memory_space<vmem>>, %arg5: memref<32x1xf32, #tpu.memory_space<vmem>>, %arg6: memref<1xf32, #tpu.memory_space<smem>>, %arg7: memref<1x32x16xf32, #tpu.memory_space<vmem>>) attributes {dimension_semantics = [#tpu.dimension_semantics<parallel>], iteration_bounds = array<i64: 2>, scalar_prefetch = 0 : i64, scratch_operands = 0 : i64, tpu.core_type = #tpu.core_type<tc>, window_params = [{transform_indices = @transform_0, window_bounds = array<i64: 1, 4, 18>}, {pipeline_mode = #tpu.pipeline_mode<synchronous>, transform_indices = @transform_1, window_bounds = array<i64: 3, 32, 4>}, {pipeline_mode = #tpu.pipeline_mode<synchronous>, transform_indices = @transform_2, window_bounds = array<i64: 32, 1>}, {pipeline_mode = #tpu.pipeline_mode<synchronous>, transform_indices = @transform_3, window_bounds = array<i64: 32, 1>}, {pipeline_mode = #tpu.pipeline_mode<synchronous>, transform_indices = @transform_4, window_bounds = array<i64: 32, 1>}, {transform_indices = @transform_5, window_bounds = array<i64: 1>}, {transform_indices = @transform_6, window_bounds = array<i64: 1, 32, 16>}]} {
    %c0 = arith.constant 0 : index
    %c0_0 = arith.constant 0 : index
    %c0_1 = arith.constant 0 : index
    %0 = vector.load %arg1[%c0, %c0_0, %c0_1] : memref<1x4x18xf32, #tpu.memory_space<vmem>>, vector<1x4x18xf32>
    %1 = vector.shape_cast %0 : vector<1x4x18xf32> to vector<4x18xf32>
    %c0_2 = arith.constant 0 : index
    %2 = memref.load %arg6[%c0_2] : memref<1xf32, #tpu.memory_space<smem>>
    %c0_3 = arith.constant 0 : index
    %c0_4 = arith.constant 0 : index
    %3 = vector.load %arg3[%c0_3, %c0_4] : memref<32x1xf32, #tpu.memory_space<vmem>>, vector<32x1xf32>
    %4 = vector.shape_cast %3 : vector<32x1xf32> to vector<32x1xf32>
    %5 = vector.broadcast %4 : vector<32x1xf32> to vector<32x16xf32>
    %c0_5 = arith.constant 0 : index
    %c0_6 = arith.constant 0 : index
    %c0_7 = arith.constant 0 : index
    %6 = vector.load %arg2[%c0_5, %c0_6, %c0_7] : memref<3x32x4xf32, #tpu.memory_space<vmem>>, vector<1x32x4xf32>
    %7 = vector.shape_cast %6 : vector<1x32x4xf32> to vector<32x4xf32>
    %8 = vector.extract_strided_slice %1 {offsets = [0, 0], sizes = [4, 16], strides = [1, 1]} : vector<4x18xf32> to vector<4x16xf32>
    %9 = vector.extract_strided_slice %7 {offsets = [0, 0], sizes = [32, 1], strides = [1, 1]} : vector<32x4xf32> to vector<32x1xf32>
    %10 = vector.extract_strided_slice %8 {offsets = [0, 0], sizes = [1, 16], strides = [1, 1]} : vector<4x16xf32> to vector<1x16xf32>
    %11 = vector.broadcast %9 : vector<32x1xf32> to vector<32x16xf32>
    %12 = vector.broadcast %10 : vector<1x16xf32> to vector<32x16xf32>
    %13 = arith.mulf %11, %12 : vector<32x16xf32>
    %14 = arith.addf %5, %13 : vector<32x16xf32>
    %15 = vector.extract_strided_slice %7 {offsets = [0, 1], sizes = [32, 1], strides = [1, 1]} : vector<32x4xf32> to vector<32x1xf32>
    %16 = vector.extract_strided_slice %8 {offsets = [1, 0], sizes = [1, 16], strides = [1, 1]} : vector<4x16xf32> to vector<1x16xf32>
    %17 = vector.broadcast %15 : vector<32x1xf32> to vector<32x16xf32>
    %18 = vector.broadcast %16 : vector<1x16xf32> to vector<32x16xf32>
    %19 = arith.mulf %17, %18 : vector<32x16xf32>
    %20 = arith.addf %14, %19 : vector<32x16xf32>
    %21 = vector.extract_strided_slice %7 {offsets = [0, 2], sizes = [32, 1], strides = [1, 1]} : vector<32x4xf32> to vector<32x1xf32>
    %22 = vector.extract_strided_slice %8 {offsets = [2, 0], sizes = [1, 16], strides = [1, 1]} : vector<4x16xf32> to vector<1x16xf32>
    %23 = vector.broadcast %21 : vector<32x1xf32> to vector<32x16xf32>
    %24 = vector.broadcast %22 : vector<1x16xf32> to vector<32x16xf32>
    %25 = arith.mulf %23, %24 : vector<32x16xf32>
    %26 = arith.addf %20, %25 : vector<32x16xf32>
    %27 = vector.extract_strided_slice %7 {offsets = [0, 3], sizes = [32, 1], strides = [1, 1]} : vector<32x4xf32> to vector<32x1xf32>
    %28 = vector.extract_strided_slice %8 {offsets = [3, 0], sizes = [1, 16], strides = [1, 1]} : vector<4x16xf32> to vector<1x16xf32>
    %29 = vector.broadcast %27 : vector<32x1xf32> to vector<32x16xf32>
    %30 = vector.broadcast %28 : vector<1x16xf32> to vector<32x16xf32>
    %31 = arith.mulf %29, %30 : vector<32x16xf32>
    %32 = arith.addf %26, %31 : vector<32x16xf32>
    %c1 = arith.constant 1 : index
    %c0_8 = arith.constant 0 : index
    %c0_9 = arith.constant 0 : index
    %33 = vector.load %arg2[%c1, %c0_8, %c0_9] : memref<3x32x4xf32, #tpu.memory_space<vmem>>, vector<1x32x4xf32>
    %34 = vector.shape_cast %33 : vector<1x32x4xf32> to vector<32x4xf32>
    %35 = vector.extract_strided_slice %1 {offsets = [0, 1], sizes = [4, 16], strides = [1, 1]} : vector<4x18xf32> to vector<4x16xf32>
    %36 = vector.extract_strided_slice %34 {offsets = [0, 0], sizes = [32, 1], strides = [1, 1]} : vector<32x4xf32> to vector<32x1xf32>
    %37 = vector.extract_strided_slice %35 {offsets = [0, 0], sizes = [1, 16], strides = [1, 1]} : vector<4x16xf32> to vector<1x16xf32>
    %38 = vector.broadcast %36 : vector<32x1xf32> to vector<32x16xf32>
    %39 = vector.broadcast %37 : vector<1x16xf32> to vector<32x16xf32>
    %40 = arith.mulf %38, %39 : vector<32x16xf32>
    %41 = arith.addf %32, %40 : vector<32x16xf32>
    %42 = vector.extract_strided_slice %34 {offsets = [0, 1], sizes = [32, 1], strides = [1, 1]} : vector<32x4xf32> to vector<32x1xf32>
    %43 = vector.extract_strided_slice %35 {offsets = [1, 0], sizes = [1, 16], strides = [1, 1]} : vector<4x16xf32> to vector<1x16xf32>
    %44 = vector.broadcast %42 : vector<32x1xf32> to vector<32x16xf32>
    %45 = vector.broadcast %43 : vector<1x16xf32> to vector<32x16xf32>
    %46 = arith.mulf %44, %45 : vector<32x16xf32>
    %47 = arith.addf %41, %46 : vector<32x16xf32>
    %48 = vector.extract_strided_slice %34 {offsets = [0, 2], sizes = [32, 1], strides = [1, 1]} : vector<32x4xf32> to vector<32x1xf32>
    %49 = vector.extract_strided_slice %35 {offsets = [2, 0], sizes = [1, 16], strides = [1, 1]} : vector<4x16xf32> to vector<1x16xf32>
    %50 = vector.broadcast %48 : vector<32x1xf32> to vector<32x16xf32>
    %51 = vector.broadcast %49 : vector<1x16xf32> to vector<32x16xf32>
    %52 = arith.mulf %50, %51 : vector<32x16xf32>
    %53 = arith.addf %47, %52 : vector<32x16xf32>
    %54 = vector.extract_strided_slice %34 {offsets = [0, 3], sizes = [32, 1], strides = [1, 1]} : vector<32x4xf32> to vector<32x1xf32>
    %55 = vector.extract_strided_slice %35 {offsets = [3, 0], sizes = [1, 16], strides = [1, 1]} : vector<4x16xf32> to vector<1x16xf32>
    %56 = vector.broadcast %54 : vector<32x1xf32> to vector<32x16xf32>
    %57 = vector.broadcast %55 : vector<1x16xf32> to vector<32x16xf32>
    %58 = arith.mulf %56, %57 : vector<32x16xf32>
    %59 = arith.addf %53, %58 : vector<32x16xf32>
    %c2 = arith.constant 2 : index
    %c0_10 = arith.constant 0 : index
    %c0_11 = arith.constant 0 : index
    %60 = vector.load %arg2[%c2, %c0_10, %c0_11] : memref<3x32x4xf32, #tpu.memory_space<vmem>>, vector<1x32x4xf32>
    %61 = vector.shape_cast %60 : vector<1x32x4xf32> to vector<32x4xf32>
    %62 = vector.extract_strided_slice %1 {offsets = [0, 2], sizes = [4, 16], strides = [1, 1]} : vector<4x18xf32> to vector<4x16xf32>
    %63 = vector.extract_strided_slice %61 {offsets = [0, 0], sizes = [32, 1], strides = [1, 1]} : vector<32x4xf32> to vector<32x1xf32>
    %64 = vector.extract_strided_slice %62 {offsets = [0, 0], sizes = [1, 16], strides = [1, 1]} : vector<4x16xf32> to vector<1x16xf32>
    %65 = vector.broadcast %63 : vector<32x1xf32> to vector<32x16xf32>
    %66 = vector.broadcast %64 : vector<1x16xf32> to vector<32x16xf32>
    %67 = arith.mulf %65, %66 : vector<32x16xf32>
    %68 = arith.addf %59, %67 : vector<32x16xf32>
    %69 = vector.extract_strided_slice %61 {offsets = [0, 1], sizes = [32, 1], strides = [1, 1]} : vector<32x4xf32> to vector<32x1xf32>
    %70 = vector.extract_strided_slice %62 {offsets = [1, 0], sizes = [1, 16], strides = [1, 1]} : vector<4x16xf32> to vector<1x16xf32>
    %71 = vector.broadcast %69 : vector<32x1xf32> to vector<32x16xf32>
    %72 = vector.broadcast %70 : vector<1x16xf32> to vector<32x16xf32>
    %73 = arith.mulf %71, %72 : vector<32x16xf32>
    %74 = arith.addf %68, %73 : vector<32x16xf32>
    %75 = vector.extract_strided_slice %61 {offsets = [0, 2], sizes = [32, 1], strides = [1, 1]} : vector<32x4xf32> to vector<32x1xf32>
    %76 = vector.extract_strided_slice %62 {offsets = [2, 0], sizes = [1, 16], strides = [1, 1]} : vector<4x16xf32> to vector<1x16xf32>
    %77 = vector.broadcast %75 : vector<32x1xf32> to vector<32x16xf32>
    %78 = vector.broadcast %76 : vector<1x16xf32> to vector<32x16xf32>
    %79 = arith.mulf %77, %78 : vector<32x16xf32>
    %80 = arith.addf %74, %79 : vector<32x16xf32>
    %81 = vector.extract_strided_slice %61 {offsets = [0, 3], sizes = [32, 1], strides = [1, 1]} : vector<32x4xf32> to vector<32x1xf32>
    %82 = vector.extract_strided_slice %62 {offsets = [3, 0], sizes = [1, 16], strides = [1, 1]} : vector<4x16xf32> to vector<1x16xf32>
    %83 = vector.broadcast %81 : vector<32x1xf32> to vector<32x16xf32>
    %84 = vector.broadcast %82 : vector<1x16xf32> to vector<32x16xf32>
    %85 = arith.mulf %83, %84 : vector<32x16xf32>
    %86 = arith.addf %80, %85 : vector<32x16xf32>
    %87 = vector.extract_strided_slice %86 {offsets = [0, 0], sizes = [4, 16], strides = [1, 1]} : vector<32x16xf32> to vector<4x16xf32>
    %88 = vector.shape_cast %87 : vector<4x16xf32> to vector<1x4x16xf32>
    %cst = arith.constant dense<0.000000e+00> : vector<1xf32>
    %89 = vector.multi_reduction <add>, %88, %cst [1, 2] : vector<1x4x16xf32> to vector<1xf32>
    %90 = vector.shape_cast %89 : vector<1xf32> to vector<1x1x1xf32>
    %91 = vector.extract %90[0, 0, 0] : f32 from vector<1x1x1xf32>
    %cst_12 = arith.constant 1.562500e-02 : f32
    %92 = arith.mulf %91, %cst_12 : f32
    %93 = vector.broadcast %92 : f32 to vector<4x16xf32>
    %94 = arith.subf %87, %93 : vector<4x16xf32>
    %95 = arith.mulf %94, %94 : vector<4x16xf32>
    %96 = vector.shape_cast %95 : vector<4x16xf32> to vector<1x4x16xf32>
    %cst_13 = arith.constant dense<0.000000e+00> : vector<1xf32>
    %97 = vector.multi_reduction <add>, %96, %cst_13 [1, 2] : vector<1x4x16xf32> to vector<1xf32>
    %98 = vector.shape_cast %97 : vector<1xf32> to vector<1x1x1xf32>
    %99 = vector.extract %98[0, 0, 0] : f32 from vector<1x1x1xf32>
    %cst_14 = arith.constant 1.562500e-02 : f32
    %100 = arith.mulf %99, %cst_14 : f32
    %cst_15 = arith.constant 9.99999974E-6 : f32
    %101 = arith.addf %100, %cst_15 : f32
    %102 = math.rsqrt %101 : f32
    %c0_16 = arith.constant 0 : index
    %c0_17 = arith.constant 0 : index
    %103 = vector.load %arg4[%c0_16, %c0_17] : memref<32x1xf32, #tpu.memory_space<vmem>>, vector<4x1xf32>
    %104 = vector.broadcast %102 : f32 to vector<4x1xf32>
    %105 = arith.mulf %104, %103 : vector<4x1xf32>
    %106 = vector.broadcast %105 : vector<4x1xf32> to vector<4x16xf32>
    %107 = arith.mulf %94, %106 : vector<4x16xf32>
    %c0_18 = arith.constant 0 : index
    %c0_19 = arith.constant 0 : index
    %108 = vector.load %arg5[%c0_18, %c0_19] : memref<32x1xf32, #tpu.memory_space<vmem>>, vector<4x1xf32>
    %109 = vector.broadcast %108 : vector<4x1xf32> to vector<4x16xf32>
    %110 = arith.addf %107, %109 : vector<4x16xf32>
    %cst_20 = arith.constant 0.000000e+00 : f32
    %111 = vector.broadcast %cst_20 : f32 to vector<4x16xf32>
    %112 = arith.maximumf %110, %111 : vector<4x16xf32>
    %cst_21 = arith.constant 0.000000e+00 : f32
    %113 = vector.broadcast %cst_21 : f32 to vector<4x16xf32>
    %114 = arith.minimumf %110, %113 : vector<4x16xf32>
    %115 = vector.broadcast %2 : f32 to vector<4x16xf32>
    %116 = arith.mulf %115, %114 : vector<4x16xf32>
    %117 = arith.addf %112, %116 : vector<4x16xf32>
    %c0_22 = arith.constant 0 : index
    %c0_23 = arith.constant 0 : index
    %c0_24 = arith.constant 0 : index
    %118 = vector.load %arg7[%c0_22, %c0_23, %c0_24] : memref<1x32x16xf32, #tpu.memory_space<vmem>>, vector<1x4x16xf32>
    %119 = vector.shape_cast %118 : vector<1x4x16xf32> to vector<4x16xf32>
    %120 = vector.shape_cast %117 : vector<4x16xf32> to vector<1x4x16xf32>
    tpu.vector_store %arg7[%c0_22, %c0_23, %c0_24], %120 {strides = array<i32>} : memref<1x32x16xf32, #tpu.memory_space<vmem>>, vector<1x4x16xf32>,
    %121 = vector.extract_strided_slice %86 {offsets = [4, 0], sizes = [4, 16], strides = [1, 1]} : vector<32x16xf32> to vector<4x16xf32>
    %122 = vector.shape_cast %121 : vector<4x16xf32> to vector<1x4x16xf32>
    %cst_25 = arith.constant dense<0.000000e+00> : vector<1xf32>
    %123 = vector.multi_reduction <add>, %122, %cst_25 [1, 2] : vector<1x4x16xf32> to vector<1xf32>
    %124 = vector.shape_cast %123 : vector<1xf32> to vector<1x1x1xf32>
    %125 = vector.extract %124[0, 0, 0] : f32 from vector<1x1x1xf32>
    %cst_26 = arith.constant 1.562500e-02 : f32
    %126 = arith.mulf %125, %cst_26 : f32
    %127 = vector.broadcast %126 : f32 to vector<4x16xf32>
    %128 = arith.subf %121, %127 : vector<4x16xf32>
    %129 = arith.mulf %128, %128 : vector<4x16xf32>
    %130 = vector.shape_cast %129 : vector<4x16xf32> to vector<1x4x16xf32>
    %cst_27 = arith.constant dense<0.000000e+00> : vector<1xf32>
    %131 = vector.multi_reduction <add>, %130, %cst_27 [1, 2] : vector<1x4x16xf32> to vector<1xf32>
    %132 = vector.shape_cast %131 : vector<1xf32> to vector<1x1x1xf32>
    %133 = vector.extract %132[0, 0, 0] : f32 from vector<1x1x1xf32>
    %cst_28 = arith.constant 1.562500e-02 : f32
    %134 = arith.mulf %133, %cst_28 : f32
    %cst_29 = arith.constant 9.99999974E-6 : f32
    %135 = arith.addf %134, %cst_29 : f32
    %136 = math.rsqrt %135 : f32
    %c4 = arith.constant 4 : index
    %c0_30 = arith.constant 0 : index
    %137 = vector.load %arg4[%c4, %c0_30] : memref<32x1xf32, #tpu.memory_space<vmem>>, vector<4x1xf32>
    %138 = vector.broadcast %136 : f32 to vector<4x1xf32>
    %139 = arith.mulf %138, %137 : vector<4x1xf32>
    %140 = vector.broadcast %139 : vector<4x1xf32> to vector<4x16xf32>
    %141 = arith.mulf %128, %140 : vector<4x16xf32>
    %c4_31 = arith.constant 4 : index
    %c0_32 = arith.constant 0 : index
    %142 = vector.load %arg5[%c4_31, %c0_32] : memref<32x1xf32, #tpu.memory_space<vmem>>, vector<4x1xf32>
    %143 = vector.broadcast %142 : vector<4x1xf32> to vector<4x16xf32>
    %144 = arith.addf %141, %143 : vector<4x16xf32>
    %cst_33 = arith.constant 0.000000e+00 : f32
    %145 = vector.broadcast %cst_33 : f32 to vector<4x16xf32>
    %146 = arith.maximumf %144, %145 : vector<4x16xf32>
    %cst_34 = arith.constant 0.000000e+00 : f32
    %147 = vector.broadcast %cst_34 : f32 to vector<4x16xf32>
    %148 = arith.minimumf %144, %147 : vector<4x16xf32>
    %149 = vector.broadcast %2 : f32 to vector<4x16xf32>
    %150 = arith.mulf %149, %148 : vector<4x16xf32>
    %151 = arith.addf %146, %150 : vector<4x16xf32>
    %c0_35 = arith.constant 0 : index
    %c4_36 = arith.constant 4 : index
    %c0_37 = arith.constant 0 : index
    %152 = vector.load %arg7[%c0_35, %c4_36, %c0_37] : memref<1x32x16xf32, #tpu.memory_space<vmem>>, vector<1x4x16xf32>
    %153 = vector.shape_cast %152 : vector<1x4x16xf32> to vector<4x16xf32>
    %154 = vector.shape_cast %151 : vector<4x16xf32> to vector<1x4x16xf32>
    tpu.vector_store %arg7[%c0_35, %c4_36, %c0_37], %154 {strides = array<i32>} : memref<1x32x16xf32, #tpu.memory_space<vmem>>, vector<1x4x16xf32>,
    %155 = vector.extract_strided_slice %86 {offsets = [8, 0], sizes = [4, 16], strides = [1, 1]} : vector<32x16xf32> to vector<4x16xf32>
    %156 = vector.shape_cast %155 : vector<4x16xf32> to vector<1x4x16xf32>
    %cst_38 = arith.constant dense<0.000000e+00> : vector<1xf32>
    %157 = vector.multi_reduction <add>, %156, %cst_38 [1, 2] : vector<1x4x16xf32> to vector<1xf32>
    %158 = vector.shape_cast %157 : vector<1xf32> to vector<1x1x1xf32>
    %159 = vector.extract %158[0, 0, 0] : f32 from vector<1x1x1xf32>
    %cst_39 = arith.constant 1.562500e-02 : f32
    %160 = arith.mulf %159, %cst_39 : f32
    %161 = vector.broadcast %160 : f32 to vector<4x16xf32>
    %162 = arith.subf %155, %161 : vector<4x16xf32>
    %163 = arith.mulf %162, %162 : vector<4x16xf32>
    %164 = vector.shape_cast %163 : vector<4x16xf32> to vector<1x4x16xf32>
    %cst_40 = arith.constant dense<0.000000e+00> : vector<1xf32>
    %165 = vector.multi_reduction <add>, %164, %cst_40 [1, 2] : vector<1x4x16xf32> to vector<1xf32>
    %166 = vector.shape_cast %165 : vector<1xf32> to vector<1x1x1xf32>
    %167 = vector.extract %166[0, 0, 0] : f32 from vector<1x1x1xf32>
    %cst_41 = arith.constant 1.562500e-02 : f32
    %168 = arith.mulf %167, %cst_41 : f32
    %cst_42 = arith.constant 9.99999974E-6 : f32
    %169 = arith.addf %168, %cst_42 : f32
    %170 = math.rsqrt %169 : f32
    %c8 = arith.constant 8 : index
    %c0_43 = arith.constant 0 : index
    %171 = vector.load %arg4[%c8, %c0_43] : memref<32x1xf32, #tpu.memory_space<vmem>>, vector<4x1xf32>
    %172 = vector.broadcast %170 : f32 to vector<4x1xf32>
    %173 = arith.mulf %172, %171 : vector<4x1xf32>
    %174 = vector.broadcast %173 : vector<4x1xf32> to vector<4x16xf32>
    %175 = arith.mulf %162, %174 : vector<4x16xf32>
    %c8_44 = arith.constant 8 : index
    %c0_45 = arith.constant 0 : index
    %176 = vector.load %arg5[%c8_44, %c0_45] : memref<32x1xf32, #tpu.memory_space<vmem>>, vector<4x1xf32>
    %177 = vector.broadcast %176 : vector<4x1xf32> to vector<4x16xf32>
    %178 = arith.addf %175, %177 : vector<4x16xf32>
    %cst_46 = arith.constant 0.000000e+00 : f32
    %179 = vector.broadcast %cst_46 : f32 to vector<4x16xf32>
    %180 = arith.maximumf %178, %179 : vector<4x16xf32>
    %cst_47 = arith.constant 0.000000e+00 : f32
    %181 = vector.broadcast %cst_47 : f32 to vector<4x16xf32>
    %182 = arith.minimumf %178, %181 : vector<4x16xf32>
    %183 = vector.broadcast %2 : f32 to vector<4x16xf32>
    %184 = arith.mulf %183, %182 : vector<4x16xf32>
    %185 = arith.addf %180, %184 : vector<4x16xf32>
    %c0_48 = arith.constant 0 : index
    %c8_49 = arith.constant 8 : index
    %c0_50 = arith.constant 0 : index
    %186 = vector.load %arg7[%c0_48, %c8_49, %c0_50] : memref<1x32x16xf32, #tpu.memory_space<vmem>>, vector<1x4x16xf32>
    %187 = vector.shape_cast %186 : vector<1x4x16xf32> to vector<4x16xf32>
    %188 = vector.shape_cast %185 : vector<4x16xf32> to vector<1x4x16xf32>
    tpu.vector_store %arg7[%c0_48, %c8_49, %c0_50], %188 {strides = array<i32>} : memref<1x32x16xf32, #tpu.memory_space<vmem>>, vector<1x4x16xf32>,
    %189 = vector.extract_strided_slice %86 {offsets = [12, 0], sizes = [4, 16], strides = [1, 1]} : vector<32x16xf32> to vector<4x16xf32>
    %190 = vector.shape_cast %189 : vector<4x16xf32> to vector<1x4x16xf32>
    %cst_51 = arith.constant dense<0.000000e+00> : vector<1xf32>
    %191 = vector.multi_reduction <add>, %190, %cst_51 [1, 2] : vector<1x4x16xf32> to vector<1xf32>
    %192 = vector.shape_cast %191 : vector<1xf32> to vector<1x1x1xf32>
    %193 = vector.extract %192[0, 0, 0] : f32 from vector<1x1x1xf32>
    %cst_52 = arith.constant 1.562500e-02 : f32
    %194 = arith.mulf %193, %cst_52 : f32
    %195 = vector.broadcast %194 : f32 to vector<4x16xf32>
    %196 = arith.subf %189, %195 : vector<4x16xf32>
    %197 = arith.mulf %196, %196 : vector<4x16xf32>
    %198 = vector.shape_cast %197 : vector<4x16xf32> to vector<1x4x16xf32>
    %cst_53 = arith.constant dense<0.000000e+00> : vector<1xf32>
    %199 = vector.multi_reduction <add>, %198, %cst_53 [1, 2] : vector<1x4x16xf32> to vector<1xf32>
    %200 = vector.shape_cast %199 : vector<1xf32> to vector<1x1x1xf32>
    %201 = vector.extract %200[0, 0, 0] : f32 from vector<1x1x1xf32>
    %cst_54 = arith.constant 1.562500e-02 : f32
    %202 = arith.mulf %201, %cst_54 : f32
    %cst_55 = arith.constant 9.99999974E-6 : f32
    %203 = arith.addf %202, %cst_55 : f32
    %204 = math.rsqrt %203 : f32
    %c12 = arith.constant 12 : index
    %c0_56 = arith.constant 0 : index
    %205 = vector.load %arg4[%c12, %c0_56] : memref<32x1xf32, #tpu.memory_space<vmem>>, vector<4x1xf32>
    %206 = vector.broadcast %204 : f32 to vector<4x1xf32>
    %207 = arith.mulf %206, %205 : vector<4x1xf32>
    %208 = vector.broadcast %207 : vector<4x1xf32> to vector<4x16xf32>
    %209 = arith.mulf %196, %208 : vector<4x16xf32>
    %c12_57 = arith.constant 12 : index
    %c0_58 = arith.constant 0 : index
    %210 = vector.load %arg5[%c12_57, %c0_58] : memref<32x1xf32, #tpu.memory_space<vmem>>, vector<4x1xf32>
    %211 = vector.broadcast %210 : vector<4x1xf32> to vector<4x16xf32>
    %212 = arith.addf %209, %211 : vector<4x16xf32>
    %cst_59 = arith.constant 0.000000e+00 : f32
    %213 = vector.broadcast %cst_59 : f32 to vector<4x16xf32>
    %214 = arith.maximumf %212, %213 : vector<4x16xf32>
    %cst_60 = arith.constant 0.000000e+00 : f32
    %215 = vector.broadcast %cst_60 : f32 to vector<4x16xf32>
    %216 = arith.minimumf %212, %215 : vector<4x16xf32>
    %217 = vector.broadcast %2 : f32 to vector<4x16xf32>
    %218 = arith.mulf %217, %216 : vector<4x16xf32>
    %219 = arith.addf %214, %218 : vector<4x16xf32>
    %c0_61 = arith.constant 0 : index
    %c12_62 = arith.constant 12 : index
    %c0_63 = arith.constant 0 : index
    %220 = vector.load %arg7[%c0_61, %c12_62, %c0_63] : memref<1x32x16xf32, #tpu.memory_space<vmem>>, vector<1x4x16xf32>
    %221 = vector.shape_cast %220 : vector<1x4x16xf32> to vector<4x16xf32>
    %222 = vector.shape_cast %219 : vector<4x16xf32> to vector<1x4x16xf32>
    tpu.vector_store %arg7[%c0_61, %c12_62, %c0_63], %222 {strides = array<i32>} : memref<1x32x16xf32, #tpu.memory_space<vmem>>, vector<1x4x16xf32>,
    %223 = vector.extract_strided_slice %86 {offsets = [16, 0], sizes = [4, 16], strides = [1, 1]} : vector<32x16xf32> to vector<4x16xf32>
    %224 = vector.shape_cast %223 : vector<4x16xf32> to vector<1x4x16xf32>
    %cst_64 = arith.constant dense<0.000000e+00> : vector<1xf32>
    %225 = vector.multi_reduction <add>, %224, %cst_64 [1, 2] : vector<1x4x16xf32> to vector<1xf32>
    %226 = vector.shape_cast %225 : vector<1xf32> to vector<1x1x1xf32>
    %227 = vector.extract %226[0, 0, 0] : f32 from vector<1x1x1xf32>
    %cst_65 = arith.constant 1.562500e-02 : f32
    %228 = arith.mulf %227, %cst_65 : f32
    %229 = vector.broadcast %228 : f32 to vector<4x16xf32>
    %230 = arith.subf %223, %229 : vector<4x16xf32>
    %231 = arith.mulf %230, %230 : vector<4x16xf32>
    %232 = vector.shape_cast %231 : vector<4x16xf32> to vector<1x4x16xf32>
    %cst_66 = arith.constant dense<0.000000e+00> : vector<1xf32>
    %233 = vector.multi_reduction <add>, %232, %cst_66 [1, 2] : vector<1x4x16xf32> to vector<1xf32>
    %234 = vector.shape_cast %233 : vector<1xf32> to vector<1x1x1xf32>
    %235 = vector.extract %234[0, 0, 0] : f32 from vector<1x1x1xf32>
    %cst_67 = arith.constant 1.562500e-02 : f32
    %236 = arith.mulf %235, %cst_67 : f32
    %cst_68 = arith.constant 9.99999974E-6 : f32
    %237 = arith.addf %236, %cst_68 : f32
    %238 = math.rsqrt %237 : f32
    %c16 = arith.constant 16 : index
    %c0_69 = arith.constant 0 : index
    %239 = vector.load %arg4[%c16, %c0_69] : memref<32x1xf32, #tpu.memory_space<vmem>>, vector<4x1xf32>
    %240 = vector.broadcast %238 : f32 to vector<4x1xf32>
    %241 = arith.mulf %240, %239 : vector<4x1xf32>
    %242 = vector.broadcast %241 : vector<4x1xf32> to vector<4x16xf32>
    %243 = arith.mulf %230, %242 : vector<4x16xf32>
    %c16_70 = arith.constant 16 : index
    %c0_71 = arith.constant 0 : index
    %244 = vector.load %arg5[%c16_70, %c0_71] : memref<32x1xf32, #tpu.memory_space<vmem>>, vector<4x1xf32>
    %245 = vector.broadcast %244 : vector<4x1xf32> to vector<4x16xf32>
    %246 = arith.addf %243, %245 : vector<4x16xf32>
    %cst_72 = arith.constant 0.000000e+00 : f32
    %247 = vector.broadcast %cst_72 : f32 to vector<4x16xf32>
    %248 = arith.maximumf %246, %247 : vector<4x16xf32>
    %cst_73 = arith.constant 0.000000e+00 : f32
    %249 = vector.broadcast %cst_73 : f32 to vector<4x16xf32>
    %250 = arith.minimumf %246, %249 : vector<4x16xf32>
    %251 = vector.broadcast %2 : f32 to vector<4x16xf32>
    %252 = arith.mulf %251, %250 : vector<4x16xf32>
    %253 = arith.addf %248, %252 : vector<4x16xf32>
    %c0_74 = arith.constant 0 : index
    %c16_75 = arith.constant 16 : index
    %c0_76 = arith.constant 0 : index
    %254 = vector.load %arg7[%c0_74, %c16_75, %c0_76] : memref<1x32x16xf32, #tpu.memory_space<vmem>>, vector<1x4x16xf32>
    %255 = vector.shape_cast %254 : vector<1x4x16xf32> to vector<4x16xf32>
    %256 = vector.shape_cast %253 : vector<4x16xf32> to vector<1x4x16xf32>
    tpu.vector_store %arg7[%c0_74, %c16_75, %c0_76], %256 {strides = array<i32>} : memref<1x32x16xf32, #tpu.memory_space<vmem>>, vector<1x4x16xf32>,
    %257 = vector.extract_strided_slice %86 {offsets = [20, 0], sizes = [4, 16], strides = [1, 1]} : vector<32x16xf32> to vector<4x16xf32>
    %258 = vector.shape_cast %257 : vector<4x16xf32> to vector<1x4x16xf32>
    %cst_77 = arith.constant dense<0.000000e+00> : vector<1xf32>
    %259 = vector.multi_reduction <add>, %258, %cst_77 [1, 2] : vector<1x4x16xf32> to vector<1xf32>
    %260 = vector.shape_cast %259 : vector<1xf32> to vector<1x1x1xf32>
    %261 = vector.extract %260[0, 0, 0] : f32 from vector<1x1x1xf32>
    %cst_78 = arith.constant 1.562500e-02 : f32
    %262 = arith.mulf %261, %cst_78 : f32
    %263 = vector.broadcast %262 : f32 to vector<4x16xf32>
    %264 = arith.subf %257, %263 : vector<4x16xf32>
    %265 = arith.mulf %264, %264 : vector<4x16xf32>
    %266 = vector.shape_cast %265 : vector<4x16xf32> to vector<1x4x16xf32>
    %cst_79 = arith.constant dense<0.000000e+00> : vector<1xf32>
    %267 = vector.multi_reduction <add>, %266, %cst_79 [1, 2] : vector<1x4x16xf32> to vector<1xf32>
    %268 = vector.shape_cast %267 : vector<1xf32> to vector<1x1x1xf32>
    %269 = vector.extract %268[0, 0, 0] : f32 from vector<1x1x1xf32>
    %cst_80 = arith.constant 1.562500e-02 : f32
    %270 = arith.mulf %269, %cst_80 : f32
    %cst_81 = arith.constant 9.99999974E-6 : f32
    %271 = arith.addf %270, %cst_81 : f32
    %272 = math.rsqrt %271 : f32
    %c20 = arith.constant 20 : index
    %c0_82 = arith.constant 0 : index
    %273 = vector.load %arg4[%c20, %c0_82] : memref<32x1xf32, #tpu.memory_space<vmem>>, vector<4x1xf32>
    %274 = vector.broadcast %272 : f32 to vector<4x1xf32>
    %275 = arith.mulf %274, %273 : vector<4x1xf32>
    %276 = vector.broadcast %275 : vector<4x1xf32> to vector<4x16xf32>
    %277 = arith.mulf %264, %276 : vector<4x16xf32>
    %c20_83 = arith.constant 20 : index
    %c0_84 = arith.constant 0 : index
    %278 = vector.load %arg5[%c20_83, %c0_84] : memref<32x1xf32, #tpu.memory_space<vmem>>, vector<4x1xf32>
    %279 = vector.broadcast %278 : vector<4x1xf32> to vector<4x16xf32>
    %280 = arith.addf %277, %279 : vector<4x16xf32>
    %cst_85 = arith.constant 0.000000e+00 : f32
    %281 = vector.broadcast %cst_85 : f32 to vector<4x16xf32>
    %282 = arith.maximumf %280, %281 : vector<4x16xf32>
    %cst_86 = arith.constant 0.000000e+00 : f32
    %283 = vector.broadcast %cst_86 : f32 to vector<4x16xf32>
    %284 = arith.minimumf %280, %283 : vector<4x16xf32>
    %285 = vector.broadcast %2 : f32 to vector<4x16xf32>
    %286 = arith.mulf %285, %284 : vector<4x16xf32>
    %287 = arith.addf %282, %286 : vector<4x16xf32>
    %c0_87 = arith.constant 0 : index
    %c20_88 = arith.constant 20 : index
    %c0_89 = arith.constant 0 : index
    %288 = vector.load %arg7[%c0_87, %c20_88, %c0_89] : memref<1x32x16xf32, #tpu.memory_space<vmem>>, vector<1x4x16xf32>
    %289 = vector.shape_cast %288 : vector<1x4x16xf32> to vector<4x16xf32>
    %290 = vector.shape_cast %287 : vector<4x16xf32> to vector<1x4x16xf32>
    tpu.vector_store %arg7[%c0_87, %c20_88, %c0_89], %290 {strides = array<i32>} : memref<1x32x16xf32, #tpu.memory_space<vmem>>, vector<1x4x16xf32>,
    %291 = vector.extract_strided_slice %86 {offsets = [24, 0], sizes = [4, 16], strides = [1, 1]} : vector<32x16xf32> to vector<4x16xf32>
    %292 = vector.shape_cast %291 : vector<4x16xf32> to vector<1x4x16xf32>
    %cst_90 = arith.constant dense<0.000000e+00> : vector<1xf32>
    %293 = vector.multi_reduction <add>, %292, %cst_90 [1, 2] : vector<1x4x16xf32> to vector<1xf32>
    %294 = vector.shape_cast %293 : vector<1xf32> to vector<1x1x1xf32>
    %295 = vector.extract %294[0, 0, 0] : f32 from vector<1x1x1xf32>
    %cst_91 = arith.constant 1.562500e-02 : f32
    %296 = arith.mulf %295, %cst_91 : f32
    %297 = vector.broadcast %296 : f32 to vector<4x16xf32>
    %298 = arith.subf %291, %297 : vector<4x16xf32>
    %299 = arith.mulf %298, %298 : vector<4x16xf32>
    %300 = vector.shape_cast %299 : vector<4x16xf32> to vector<1x4x16xf32>
    %cst_92 = arith.constant dense<0.000000e+00> : vector<1xf32>
    %301 = vector.multi_reduction <add>, %300, %cst_92 [1, 2] : vector<1x4x16xf32> to vector<1xf32>
    %302 = vector.shape_cast %301 : vector<1xf32> to vector<1x1x1xf32>
    %303 = vector.extract %302[0, 0, 0] : f32 from vector<1x1x1xf32>
    %cst_93 = arith.constant 1.562500e-02 : f32
    %304 = arith.mulf %303, %cst_93 : f32
    %cst_94 = arith.constant 9.99999974E-6 : f32
    %305 = arith.addf %304, %cst_94 : f32
    %306 = math.rsqrt %305 : f32
    %c24 = arith.constant 24 : index
    %c0_95 = arith.constant 0 : index
    %307 = vector.load %arg4[%c24, %c0_95] : memref<32x1xf32, #tpu.memory_space<vmem>>, vector<4x1xf32>
    %308 = vector.broadcast %306 : f32 to vector<4x1xf32>
    %309 = arith.mulf %308, %307 : vector<4x1xf32>
    %310 = vector.broadcast %309 : vector<4x1xf32> to vector<4x16xf32>
    %311 = arith.mulf %298, %310 : vector<4x16xf32>
    %c24_96 = arith.constant 24 : index
    %c0_97 = arith.constant 0 : index
    %312 = vector.load %arg5[%c24_96, %c0_97] : memref<32x1xf32, #tpu.memory_space<vmem>>, vector<4x1xf32>
    %313 = vector.broadcast %312 : vector<4x1xf32> to vector<4x16xf32>
    %314 = arith.addf %311, %313 : vector<4x16xf32>
    %cst_98 = arith.constant 0.000000e+00 : f32
    %315 = vector.broadcast %cst_98 : f32 to vector<4x16xf32>
    %316 = arith.maximumf %314, %315 : vector<4x16xf32>
    %cst_99 = arith.constant 0.000000e+00 : f32
    %317 = vector.broadcast %cst_99 : f32 to vector<4x16xf32>
    %318 = arith.minimumf %314, %317 : vector<4x16xf32>
    %319 = vector.broadcast %2 : f32 to vector<4x16xf32>
    %320 = arith.mulf %319, %318 : vector<4x16xf32>
    %321 = arith.addf %316, %320 : vector<4x16xf32>
    %c0_100 = arith.constant 0 : index
    %c24_101 = arith.constant 24 : index
    %c0_102 = arith.constant 0 : index
    %322 = vector.load %arg7[%c0_100, %c24_101, %c0_102] : memref<1x32x16xf32, #tpu.memory_space<vmem>>, vector<1x4x16xf32>
    %323 = vector.shape_cast %322 : vector<1x4x16xf32> to vector<4x16xf32>
    %324 = vector.shape_cast %321 : vector<4x16xf32> to vector<1x4x16xf32>
    tpu.vector_store %arg7[%c0_100, %c24_101, %c0_102], %324 {strides = array<i32>} : memref<1x32x16xf32, #tpu.memory_space<vmem>>, vector<1x4x16xf32>,
    %325 = vector.extract_strided_slice %86 {offsets = [28, 0], sizes = [4, 16], strides = [1, 1]} : vector<32x16xf32> to vector<4x16xf32>
    %326 = vector.shape_cast %325 : vector<4x16xf32> to vector<1x4x16xf32>
    %cst_103 = arith.constant dense<0.000000e+00> : vector<1xf32>
    %327 = vector.multi_reduction <add>, %326, %cst_103 [1, 2] : vector<1x4x16xf32> to vector<1xf32>
    %328 = vector.shape_cast %327 : vector<1xf32> to vector<1x1x1xf32>
    %329 = vector.extract %328[0, 0, 0] : f32 from vector<1x1x1xf32>
    %cst_104 = arith.constant 1.562500e-02 : f32
    %330 = arith.mulf %329, %cst_104 : f32
    %331 = vector.broadcast %330 : f32 to vector<4x16xf32>
    %332 = arith.subf %325, %331 : vector<4x16xf32>
    %333 = arith.mulf %332, %332 : vector<4x16xf32>
    %334 = vector.shape_cast %333 : vector<4x16xf32> to vector<1x4x16xf32>
    %cst_105 = arith.constant dense<0.000000e+00> : vector<1xf32>
    %335 = vector.multi_reduction <add>, %334, %cst_105 [1, 2] : vector<1x4x16xf32> to vector<1xf32>
    %336 = vector.shape_cast %335 : vector<1xf32> to vector<1x1x1xf32>
    %337 = vector.extract %336[0, 0, 0] : f32 from vector<1x1x1xf32>
    %cst_106 = arith.constant 1.562500e-02 : f32
    %338 = arith.mulf %337, %cst_106 : f32
    %cst_107 = arith.constant 9.99999974E-6 : f32
    %339 = arith.addf %338, %cst_107 : f32
    %340 = math.rsqrt %339 : f32
    %c28 = arith.constant 28 : index
    %c0_108 = arith.constant 0 : index
    %341 = vector.load %arg4[%c28, %c0_108] : memref<32x1xf32, #tpu.memory_space<vmem>>, vector<4x1xf32>
    %342 = vector.broadcast %340 : f32 to vector<4x1xf32>
    %343 = arith.mulf %342, %341 : vector<4x1xf32>
    %344 = vector.broadcast %343 : vector<4x1xf32> to vector<4x16xf32>
    %345 = arith.mulf %332, %344 : vector<4x16xf32>
    %c28_109 = arith.constant 28 : index
    %c0_110 = arith.constant 0 : index
    %346 = vector.load %arg5[%c28_109, %c0_110] : memref<32x1xf32, #tpu.memory_space<vmem>>, vector<4x1xf32>
    %347 = vector.broadcast %346 : vector<4x1xf32> to vector<4x16xf32>
    %348 = arith.addf %345, %347 : vector<4x16xf32>
    %cst_111 = arith.constant 0.000000e+00 : f32
    %349 = vector.broadcast %cst_111 : f32 to vector<4x16xf32>
    %350 = arith.maximumf %348, %349 : vector<4x16xf32>
    %cst_112 = arith.constant 0.000000e+00 : f32
    %351 = vector.broadcast %cst_112 : f32 to vector<4x16xf32>
    %352 = arith.minimumf %348, %351 : vector<4x16xf32>
    %353 = vector.broadcast %2 : f32 to vector<4x16xf32>
    %354 = arith.mulf %353, %352 : vector<4x16xf32>
    %355 = arith.addf %350, %354 : vector<4x16xf32>
    %c0_113 = arith.constant 0 : index
    %c28_114 = arith.constant 28 : index
    %c0_115 = arith.constant 0 : index
    %356 = vector.load %arg7[%c0_113, %c28_114, %c0_115] : memref<1x32x16xf32, #tpu.memory_space<vmem>>, vector<1x4x16xf32>
    %357 = vector.shape_cast %356 : vector<1x4x16xf32> to vector<4x16xf32>
    %358 = vector.shape_cast %355 : vector<4x16xf32> to vector<1x4x16xf32>
    tpu.vector_store %arg7[%c0_113, %c28_114, %c0_115], %358 {strides = array<i32>} : memref<1x32x16xf32, #tpu.memory_space<vmem>>, vector<1x4x16xf32>,
    return
  }
  func.func @transform_0(%arg0: i32) -> (i32, i32, i32) {
    %c0_i32 = arith.constant 0 : i32
    %c0_i32_0 = arith.constant 0 : i32
    %c0_i32_1 = arith.constant 0 : i32
    return %arg0, %c0_i32, %c0_i32_0 : i32, i32, i32
  }
  func.func @transform_1(%arg0: i32) -> (i32, i32, i32) {
    %c0_i32 = arith.constant 0 : i32
    %c0_i32_0 = arith.constant 0 : i32
    %c0_i32_1 = arith.constant 0 : i32
    %c0_i32_2 = arith.constant 0 : i32
    return %c0_i32, %c0_i32_0, %c0_i32_1 : i32, i32, i32
  }
  func.func @transform_2(%arg0: i32) -> (i32, i32) {
    %c0_i32 = arith.constant 0 : i32
    %c0_i32_0 = arith.constant 0 : i32
    %c0_i32_1 = arith.constant 0 : i32
    return %c0_i32, %c0_i32_0 : i32, i32
  }
  func.func @transform_3(%arg0: i32) -> (i32, i32) {
    %c0_i32 = arith.constant 0 : i32
    %c0_i32_0 = arith.constant 0 : i32
    %c0_i32_1 = arith.constant 0 : i32
    return %c0_i32, %c0_i32_0 : i32, i32
  }
  func.func @transform_4(%arg0: i32) -> (i32, i32) {
    %c0_i32 = arith.constant 0 : i32
    %c0_i32_0 = arith.constant 0 : i32
    %c0_i32_1 = arith.constant 0 : i32
    return %c0_i32, %c0_i32_0 : i32, i32
  }
  func.func @transform_5(%arg0: i32) -> i32 {
    %c0_i32 = arith.constant 0 : i32
    %c0_i32_0 = arith.constant 0 : i32
    return %c0_i32 : i32
  }
  func.func @transform_6(%arg0: i32) -> (i32, i32, i32) {
    %c0_i32 = arith.constant 0 : i32
    %c0_i32_0 = arith.constant 0 : i32
    %c0_i32_1 = arith.constant 0 : i32
    return %arg0, %c0_i32, %c0_i32_0 : i32, i32, i32
  }
}

</mosaic_0001>

<llo_original>
// kernel: tpu_custom_call.1
$region0: #{tpu_custom_call.1}
  #allocation0 [shape = 'u32[]', space=smem, size = 0x4, offset = 0x4, fixed_abs, tag = 'smem constant byte address 0x4 - core index']
  #allocation1 [shape = 'u32[72,128]{1,0:T(1,128)}', space=vmem, size = 0x9000, scoped, tag = 'internal scratch']
  #allocation2 [shape = 'f32[1]{0:T(128)S(6)}', space=smem, size = 0x200, scoped, tag = 'scoped memory for tpu_custom_call.1']
  %s0 = inlined_call_operand.vmem [shape: f32[2,4,18], index: 0, kind: input, shape index: {}]
  %s1 = inlined_call_operand.vmem [shape: f32[3,32,4], index: 1, kind: input, shape index: {}]
  %s2 = inlined_call_operand.vmem [shape: f32[32,1], index: 2, kind: input, shape index: {}]
  %s3 = inlined_call_operand.vmem [shape: f32[32,1], index: 3, kind: input, shape index: {}]
  %s4 = inlined_call_operand.vmem [shape: f32[32,1], index: 4, kind: input, shape index: {}]
  %s5 = inlined_call_operand.<no memory space> [shape: f32[1], index: 5, kind: input, shape index: {}]
  %s6 = inlined_call_operand.vmem [shape: f32[2,32,16], index: 6, kind: output, shape index: {}]
  %s7 = sld [smem:[#allocation0]]
  $region57: #{tpu_custom_call.1} parent=0
    _
  %s9 = ssub.s32 1, %s7
  %s10 = scalar_select 0, %s9, %s7
  %11 = sst [smem:[#allocation2]] %s5
  loop: start=0, step=1, limit=4
  $region2: #{tpu_custom_call.1} parent=0 // loop_pre_header
    _
  $region3: #{tpu_custom_call.1} parent=0 // loop_header
    %s13 = sphi 0, %s17
    %p14 = scmp.ge.s32.totalorder %s13, 4
    %s23 = sphi 0, %s25
    %s26 = sphi 0, %s23
    %s27 = sphi 0, %s26
    %s43 = sphi 0, %s27
    %s47 = sphi 0, %s47
    %s49 = sphi 0, %s47
    %s50 = sphi 0, %s49
    %s64 = sphi 0, %s50
    %s68 = sphi 0, %s68
    %s70 = sphi 0, %s68
    %s71 = sphi 0, %s70
    %s85 = sphi 0, %s71
    %s89 = sphi 0, %s89
    %s91 = sphi 0, %s89
    %s92 = sphi 0, %s91
    %s106 = sphi 0, %s92
    %s110 = sphi 0, %s110
    %s112 = sphi 0, %s110
    %s113 = sphi 0, %s112
    %s127 = sphi 0, %s113
    %s131 = sphi 0, %s131
    %s133 = sphi 0, %s131
    %s134 = sphi 0, %s133
    %s148 = sphi 0, %s134
    %s154 = sphi 0, %s156
    %s157 = sphi 0, %s154
    %s158 = sphi 0, %s157
    %s174 = sphi 0, %s158
  $region4: #{tpu_custom_call.1} parent=0 // loop_header_branch
    %16 = sbr.rel (%p14) target = $region8
  $region5: #{tpu_custom_call.1} parent=0 // loop_body
    %s18 = ssub.s32 %s13, 1
    %s19 = ssub.s32 %s13, 2
    %s20 = sadd.s32 %s13, 1
    %s21 = ssub.s32 %s13, %s20
    %p22 = scmp.eq.s32.totalorder %s21, 0
    %s24 = sadd.s32 %s23, 1
    %s25 = scalar_select %p22, %s23, %s24
    %p28 = pneg %p22
    %p29 = scmp.eq.s32.totalorder %s13, 1
    %p30 = por %p28, %p29
    %p31 = scmp.ne.s32.totalorder %s23, %s26
    %p32 = scmp.eq.s32.totalorder %s13, 0
    %p33 = por %p31, %p32
    %p34 = scmp.ne.s32.totalorder %s23, %s26
    %p35 = scmp.eq.s32.totalorder %s18, 1
    %p36 = por %p34, %p35
    %p37 = scmp.ne.s32.totalorder %s26, %s27
    %p38 = scmp.eq.s32.totalorder %s18, 0
    %p39 = por %p37, %p38
    %p40 = scmp.ne.s32.totalorder %s26, %s27
    %p41 = scmp.eq.s32.totalorder %s19, 1
    %p42 = por %p40, %p41
    %p44 = scmp.ne.s32.totalorder %s27, %s43
    %p45 = scmp.eq.s32.totalorder %s19, 0
    %p46 = por %p44, %p45
    %s48 = sadd.s32 %s47, 1
    %p51 = scmp.eq.s32.totalorder %s13, 1
    %p52 = scmp.ne.s32.totalorder %s47, %s49
    %p53 = scmp.eq.s32.totalorder %s13, 0
    %p54 = por %p52, %p53
    %p55 = scmp.ne.s32.totalorder %s47, %s49
    %p56 = scmp.eq.s32.totalorder %s18, 1
    %p57 = por %p55, %p56
    %p58 = scmp.ne.s32.totalorder %s49, %s50
    %p59 = scmp.eq.s32.totalorder %s18, 0
    %p60 = por %p58, %p59
    %p61 = scmp.ne.s32.totalorder %s49, %s50
    %p62 = scmp.eq.s32.totalorder %s19, 1
    %p63 = por %p61, %p62
    %p65 = scmp.ne.s32.totalorder %s50, %s64
    %p66 = scmp.eq.s32.totalorder %s19, 0
    %p67 = por %p65, %p66
    %s69 = sadd.s32 %s68, 1
    %p72 = scmp.eq.s32.totalorder %s13, 1
    %p73 = scmp.ne.s32.totalorder %s68, %s70
    %p74 = scmp.eq.s32.totalorder %s13, 0
    %p75 = por %p73, %p74
    %p76 = scmp.ne.s32.totalorder %s68, %s70
    %p77 = scmp.eq.s32.totalorder %s18, 1
    %p78 = por %p76, %p77
    %p79 = scmp.ne.s32.totalorder %s70, %s71
    %p80 = scmp.eq.s32.totalorder %s18, 0
    %p81 = por %p79, %p80
    %p82 = scmp.ne.s32.totalorder %s70, %s71
    %p83 = scmp.eq.s32.totalorder %s19, 1
    %p84 = por %p82, %p83
    %p86 = scmp.ne.s32.totalorder %s71, %s85
    %p87 = scmp.eq.s32.totalorder %s19, 0
    %p88 = por %p86, %p87
    %s90 = sadd.s32 %s89, 1
    %p93 = scmp.eq.s32.totalorder %s13, 1
    %p94 = scmp.ne.s32.totalorder %s89, %s91
    %p95 = scmp.eq.s32.totalorder %s13, 0
    %p96 = por %p94, %p95
    %p97 = scmp.ne.s32.totalorder %s89, %s91
    %p98 = scmp.eq.s32.totalorder %s18, 1
    %p99 = por %p97, %p98
    %p100 = scmp.ne.s32.totalorder %s91, %s92
    %p101 = scmp.eq.s32.totalorder %s18, 0
    %p102 = por %p100, %p101
    %p103 = scmp.ne.s32.totalorder %s91, %s92
    %p104 = scmp.eq.s32.totalorder %s19, 1
    %p105 = por %p103, %p104
    %p107 = scmp.ne.s32.totalorder %s92, %s106
    %p108 = scmp.eq.s32.totalorder %s19, 0
    %p109 = por %p107, %p108
    %s111 = sadd.s32 %s110, 1
    %p114 = scmp.eq.s32.totalorder %s13, 1
    %p115 = scmp.ne.s32.totalorder %s110, %s112
    %p116 = scmp.eq.s32.totalorder %s13, 0
    %p117 = por %p115, %p116
    %p118 = scmp.ne.s32.totalorder %s110, %s112
    %p119 = scmp.eq.s32.totalorder %s18, 1
    %p120 = por %p118, %p119
    %p121 = scmp.ne.s32.totalorder %s112, %s113
    %p122 = scmp.eq.s32.totalorder %s18, 0
    %p123 = por %p121, %p122
    %p124 = scmp.ne.s32.totalorder %s112, %s113
    %p125 = scmp.eq.s32.totalorder %s19, 1
    %p126 = por %p124, %p125
    %p128 = scmp.ne.s32.totalorder %s113, %s127
    %p129 = scmp.eq.s32.totalorder %s19, 0
    %p130 = por %p128, %p129
    %s132 = sadd.s32 %s131, 1
    %p135 = scmp.eq.s32.totalorder %s13, 1
    %p136 = scmp.ne.s32.totalorder %s131, %s133
    %p137 = scmp.eq.s32.totalorder %s13, 0
    %p138 = por %p136, %p137
    %p139 = scmp.ne.s32.totalorder %s131, %s133
    %p140 = scmp.eq.s32.totalorder %s18, 1
    %p141 = por %p139, %p140
    %p142 = scmp.ne.s32.totalorder %s133, %s134
    %p143 = scmp.eq.s32.totalorder %s18, 0
    %p144 = por %p142, %p143
    %p145 = scmp.ne.s32.totalorder %s133, %s134
    %p146 = scmp.eq.s32.totalorder %s19, 1
    %p147 = por %p145, %p146
    %p149 = scmp.ne.s32.totalorder %s134, %s148
    %p150 = scmp.eq.s32.totalorder %s19, 0
    %p151 = por %p149, %p150
    %s152 = ssub.s32 %s13, %s20
    %p153 = scmp.eq.s32.totalorder %s152, 0
    %s155 = sadd.s32 %s154, 1
    %s156 = scalar_select %p153, %s154, %s155
    %p159 = pneg %p153
    %p160 = scmp.eq.s32.totalorder %s13, 1
    %p161 = por %p159, %p160
    %p162 = scmp.ne.s32.totalorder %s154, %s157
    %p163 = scmp.eq.s32.totalorder %s13, 0
    %p164 = por %p162, %p163
    %p165 = scmp.ne.s32.totalorder %s154, %s157
    %p166 = scmp.eq.s32.totalorder %s18, 1
    %p167 = por %p165, %p166
    %p168 = scmp.ne.s32.totalorder %s157, %s158
    %p169 = scmp.eq.s32.totalorder %s18, 0
    %p170 = por %p168, %p169
    %p171 = scmp.ne.s32.totalorder %s157, %s158
    %p172 = scmp.eq.s32.totalorder %s19, 1
    %p173 = por %p171, %p172
    %p175 = scmp.ne.s32.totalorder %s158, %s174
    %p176 = scmp.eq.s32.totalorder %s19, 0
    %p177 = por %p175, %p176
    %p178 = scmp.le.s32.totalorder 1, %s13
    %p179 = scmp.lt.s32.totalorder %s13, 3
    %p180 = pnand %p178, %p179
    %p181 = pneg %p180
    // Predicated region
    $region9: #{tpu_custom_call.1} parent=5 // pred_check
      _
    $region10: #{tpu_custom_call.1} parent=5 // pred_check_branch
      %183 = sbr.rel (%p180) target = $region12
    $region11: #{tpu_custom_call.1} parent=5 // pred_region
      %s184 = ssub.s32 %s13, 1
      // Predicated region
      $region13: #{tpu_custom_call.1} parent=11 // pred_check
        %p185 = pneg %p60
      $region14: #{tpu_custom_call.1} parent=11 // pred_check_branch
        %187 = sbr.rel (%p185) target = $region16
      $region15: #{tpu_custom_call.1} parent=11 // pred_region
        _
      $region16: #{tpu_custom_call.1} parent=11 // pred_fallthru
        _
      // Predicated region
      $region17: #{tpu_custom_call.1} parent=11 // pred_check
        %p188 = pneg %p81
      $region18: #{tpu_custom_call.1} parent=11 // pred_check_branch
        %190 = sbr.rel (%p188) target = $region20
      $region19: #{tpu_custom_call.1} parent=11 // pred_region
        _
      $region20: #{tpu_custom_call.1} parent=11 // pred_fallthru
        _
      // Predicated region
      $region21: #{tpu_custom_call.1} parent=11 // pred_check
        %p191 = pneg %p102
      $region22: #{tpu_custom_call.1} parent=11 // pred_check_branch
        %193 = sbr.rel (%p191) target = $region24
      $region23: #{tpu_custom_call.1} parent=11 // pred_region
        _
      $region24: #{tpu_custom_call.1} parent=11 // pred_fallthru
        _
      // Predicated region
      $region25: #{tpu_custom_call.1} parent=11 // pred_check
        %p194 = pneg %p123
      $region26: #{tpu_custom_call.1} parent=11 // pred_check_branch
        %196 = sbr.rel (%p194) target = $region28
      $region27: #{tpu_custom_call.1} parent=11 // pred_region
        _
      $region28: #{tpu_custom_call.1} parent=11 // pred_fallthru
        _
      // Predicated region
      $region29: #{tpu_custom_call.1} parent=11 // pred_check
        %p197 = pneg %p144
      $region30: #{tpu_custom_call.1} parent=11 // pred_check_branch
        %199 = sbr.rel (%p197) target = $region32
      $region31: #{tpu_custom_call.1} parent=11 // pred_region
        _
      $region32: #{tpu_custom_call.1} parent=11 // pred_fallthru
        _
    $region12: #{tpu_custom_call.1} parent=5 // pred_fallthru
      _
    %p200 = scmp.lt.s32.totalorder %s13, 2
    // Predicated region
    $region33: #{tpu_custom_call.1} parent=5 // pred_check
      %p201 = pneg %p200
    $region34: #{tpu_custom_call.1} parent=5 // pred_check_branch
      %203 = sbr.rel (%p201) target = $region36
    $region35: #{tpu_custom_call.1} parent=5 // pred_region
      // Predicated region
      $region37: #{tpu_custom_call.1} parent=35 // pred_check
        %p204 = pneg %p33
      $region38: #{tpu_custom_call.1} parent=35 // pred_check_branch
        %206 = sbr.rel (%p204) target = $region40
      $region39: #{tpu_custom_call.1} parent=35 // pred_region
        %p207 = scmp.lt.s32.totalorder %s13, 1
        %s208 = scalar_select %p207, %s13, 1
        %s209 = smul.addr %s208, 4
        %s210 = scalar_lea.vmem %s0, %s209
      $region40: #{tpu_custom_call.1} parent=35 // pred_fallthru
        _
    $region36: #{tpu_custom_call.1} parent=5 // pred_fallthru
      _
    %p211 = scmp.le.s32.totalorder 1, %s13
    %p212 = scmp.lt.s32.totalorder %s13, 3
    %p213 = pnand %p211, %p212
    %p214 = pneg %p213
    // Predicated region
    $region41: #{tpu_custom_call.1} parent=5 // pred_check
      _
    $region42: #{tpu_custom_call.1} parent=5 // pred_check_branch
      %216 = sbr.rel (%p213) target = $region44
    $region43: #{tpu_custom_call.1} parent=5 // pred_region
      %s217 = ssub.s32 %s13, 1
      %p218 = scmp.lt.s32.totalorder %s18, 1
      %s219 = scalar_select %p218, %s18, 1
      %s220 = smul.addr %s219, 4
      %s221 = scalar_lea.vmem %s0, %s220
      %p222 = pneg %p39
      %p223 = pneg %p36
      %p224 = pneg %p60
      %p225 = pneg %p57
      %p226 = pneg %p81
      %p227 = pneg %p78
      %p228 = pneg %p102
      %p229 = pneg %p99
      %p230 = pneg %p123
      %p231 = pneg %p120
      %p232 = pneg %p144
      %p233 = pneg %p141
      %p234 = pneg %p170
      %p235 = pneg %p167
      %p236 = scmp.lt.s32.totalorder %s18, 1
      %s237 = scalar_select %p236, %s18, 1
      %s238 = smul.addr %s237, 4
      %s239 = smul.addr %s238, 8
      %s240 = scalar_lea.vmem %s6, %s239
      %p241 = scmp.lt.s32.totalorder %s18, 1
      %s242 = scalar_select %p241, %s18, 1
      %s243 = smul.addr %s242, 4
      %s244 = scalar_lea.vmem %s0, %s243
      %p245 = scmp.lt.s32.totalorder %s18, 1
      %s246 = scalar_select %p245, %s18, 1
      %s247 = smul.addr %s246, 4
      %s248 = smul.addr %s247, 8
      %s249 = scalar_lea.vmem %s6, %s248
      %v250 = vld [vmem:[%s244] sm:$0xf]
      %s251 = sld [smem:[#allocation2]]
      %v252 = vld [vmem:[%s2] sm:$0xff]
      %v253 = vld [vmem:[%s2 + $0x8] sm:$0xff]
      %v254 = vld [vmem:[%s2 + $0x10] sm:$0xff]
      %v255 = vld [vmem:[%s2 + $0x18] sm:$0xff]
      %257 = vset.pattern.permute.xlu0 0
      %258 = vperm.xlu0 %257, %v252
      %v259 = vpop.permute.xlu0 %258
      %262 = vset.pattern.permute.xlu0 0
      %263 = vperm.xlu0 %262, %v253
      %v264 = vpop.permute.xlu0 %263
      %267 = vset.pattern.permute.xlu0 0
      %268 = vperm.xlu0 %267, %v254
      %v269 = vpop.permute.xlu0 %268
      %272 = vset.pattern.permute.xlu0 0
      %273 = vperm.xlu0 %272, %v255
      %v274 = vpop.permute.xlu0 %273
      %v276 = vld [vmem:[%s1] sm:$0xff]
      %v277 = vld [vmem:[%s1 + $0x8] sm:$0xff]
      %v278 = vld [vmem:[%s1 + $0x10] sm:$0xff]
      %v279 = vld [vmem:[%s1 + $0x18] sm:$0xff]
      %281 = vset.pattern.permute.xlu0 0
      %282 = vperm.xlu0 %281, %v276
      %v283 = vpop.permute.xlu0 %282
      %286 = vset.pattern.permute.xlu0 0
      %287 = vperm.xlu0 %286, %v277
      %v288 = vpop.permute.xlu0 %287
      %291 = vset.pattern.permute.xlu0 0
      %292 = vperm.xlu0 %291, %v278
      %v293 = vpop.permute.xlu0 %292
      %296 = vset.pattern.permute.xlu0 0
      %297 = vperm.xlu0 %296, %v279
      %v298 = vpop.permute.xlu0 %297
      %v300 = vperm.slane %v250, 0
      %v301 = vmul.f32 %v283, %v300
      %v302 = vmul.f32 %v288, %v300
      %v303 = vmul.f32 %v293, %v300
      %v304 = vmul.f32 %v298, %v300
      %v305 = vadd.f32 %v259, %v301
      %v306 = vadd.f32 %v264, %v302
      %v307 = vadd.f32 %v269, %v303
      %v308 = vadd.f32 %v274, %v304
      %309 = vset.pattern.permute.xlu0 1
      %310 = vperm.xlu0 %309, %v276
      %v311 = vpop.permute.xlu0 %310
      %313 = vset.pattern.permute.xlu0 1
      %314 = vperm.xlu0 %313, %v277
      %v315 = vpop.permute.xlu0 %314
      %317 = vset.pattern.permute.xlu0 1
      %318 = vperm.xlu0 %317, %v278
      %v319 = vpop.permute.xlu0 %318
      %321 = vset.pattern.permute.xlu0 1
      %322 = vperm.xlu0 %321, %v279
      %v323 = vpop.permute.xlu0 %322
      %v325 = vperm.slane %v250, 1
      %v326 = vmul.f32 %v311, %v325
      %v327 = vmul.f32 %v315, %v325
      %v328 = vmul.f32 %v319, %v325
      %v329 = vmul.f32 %v323, %v325
      %v330 = vadd.f32 %v305, %v326
      %v331 = vadd.f32 %v306, %v327
      %v332 = vadd.f32 %v307, %v328
      %v333 = vadd.f32 %v308, %v329
      %334 = vset.pattern.permute.xlu0 2
      %335 = vperm.xlu0 %334, %v276
      %v336 = vpop.permute.xlu0 %335
      %338 = vset.pattern.permute.xlu0 2
      %339 = vperm.xlu0 %338, %v277
      %v340 = vpop.permute.xlu0 %339
      %342 = vset.pattern.permute.xlu0 2
      %343 = vperm.xlu0 %342, %v278
      %v344 = vpop.permute.xlu0 %343
      %346 = vset.pattern.permute.xlu0 2
      %347 = vperm.xlu0 %346, %v279
      %v348 = vpop.permute.xlu0 %347
      %v350 = vperm.slane %v250, 2
      %v351 = vmul.f32 %v336, %v350
      %v352 = vmul.f32 %v340, %v350
      %v353 = vmul.f32 %v344, %v350
      %v354 = vmul.f32 %v348, %v350
      %v355 = vadd.f32 %v330, %v351
      %v356 = vadd.f32 %v331, %v352
      %v357 = vadd.f32 %v332, %v353
      %v358 = vadd.f32 %v333, %v354
      %359 = vset.pattern.permute.xlu0 3
      %360 = vperm.xlu0 %359, %v276
      %v361 = vpop.permute.xlu0 %360
      %363 = vset.pattern.permute.xlu0 3
      %364 = vperm.xlu0 %363, %v277
      %v365 = vpop.permute.xlu0 %364
      %367 = vset.pattern.permute.xlu0 3
      %368 = vperm.xlu0 %367, %v278
      %v369 = vpop.permute.xlu0 %368
      %371 = vset.pattern.permute.xlu0 3
      %372 = vperm.xlu0 %371, %v279
      %v373 = vpop.permute.xlu0 %372
      %v375 = vperm.slane %v250, 3
      %v376 = vmul.f32 %v361, %v375
      %v377 = vmul.f32 %v365, %v375
      %v378 = vmul.f32 %v369, %v375
      %v379 = vmul.f32 %v373, %v375
      %v380 = vadd.f32 %v355, %v376
      %v381 = vadd.f32 %v356, %v377
      %v382 = vadd.f32 %v357, %v378
      %v383 = vadd.f32 %v358, %v379
      %s384 = scalar_lea.vmem %s1, 32
      %v385 = vld [vmem:[%s384] sm:$0xff]
      %v386 = vld [vmem:[%s384 + $0x8] sm:$0xff]
      %v387 = vld [vmem:[%s384 + $0x10] sm:$0xff]
      %v388 = vld [vmem:[%s384 + $0x18] sm:$0xff]
      %390 = vset.pattern.permute.xlu0 0
      %391 = vperm.xlu0 %390, %v385
      %v392 = vpop.permute.xlu0 %391
      %395 = vset.pattern.permute.xlu0 0
      %396 = vperm.xlu0 %395, %v386
      %v397 = vpop.permute.xlu0 %396
      %400 = vset.pattern.permute.xlu0 0
      %401 = vperm.xlu0 %400, %v387
      %v402 = vpop.permute.xlu0 %401
      %405 = vset.pattern.permute.xlu0 0
      %406 = vperm.xlu0 %405, %v388
      %v407 = vpop.permute.xlu0 %406
      %v409 = vmul.f32 %v392, %v300
      %v410 = vmul.f32 %v397, %v300
      %v411 = vmul.f32 %v402, %v300
      %v412 = vmul.f32 %v407, %v300
      %417 = vrot.lane.b32.xlu0 %v409, 127
      %v418 = vpop.permute.xlu0 %417
      %419 = vrot.lane.b32.xlu0 %v410, 127
      %v420 = vpop.permute.xlu0 %419
      %421 = vrot.lane.b32.xlu0 %v411, 127
      %v422 = vpop.permute.xlu0 %421
      %423 = vrot.lane.b32.xlu0 %v412, 127
      %v424 = vpop.permute.xlu0 %423
      %v429 = vadd.f32 %v380, %v418
      %v430 = vadd.f32 %v381, %v420
      %v431 = vadd.f32 %v382, %v422
      %v432 = vadd.f32 %v383, %v424
      %433 = vset.pattern.permute.xlu0 1
      %434 = vperm.xlu0 %433, %v385
      %v435 = vpop.permute.xlu0 %434
      %437 = vset.pattern.permute.xlu0 1
      %438 = vperm.xlu0 %437, %v386
      %v439 = vpop.permute.xlu0 %438
      %441 = vset.pattern.permute.xlu0 1
      %442 = vperm.xlu0 %441, %v387
      %v443 = vpop.permute.xlu0 %442
      %445 = vset.pattern.permute.xlu0 1
      %446 = vperm.xlu0 %445, %v388
      %v447 = vpop.permute.xlu0 %446
      %v449 = vmul.f32 %v435, %v325
      %v450 = vmul.f32 %v439, %v325
      %v451 = vmul.f32 %v443, %v325
      %v452 = vmul.f32 %v447, %v325
      %457 = vrot.lane.b32.xlu0 %v449, 127
      %v458 = vpop.permute.xlu0 %457
      %459 = vrot.lane.b32.xlu0 %v450, 127
      %v460 = vpop.permute.xlu0 %459
      %461 = vrot.lane.b32.xlu0 %v451, 127
      %v462 = vpop.permute.xlu0 %461
      %463 = vrot.lane.b32.xlu0 %v452, 127
      %v464 = vpop.permute.xlu0 %463
      %v469 = vadd.f32 %v429, %v458
      %v470 = vadd.f32 %v430, %v460
      %v471 = vadd.f32 %v431, %v462
      %v472 = vadd.f32 %v432, %v464
      %473 = vset.pattern.permute.xlu0 2
      %474 = vperm.xlu0 %473, %v385
      %v475 = vpop.permute.xlu0 %474
      %477 = vset.pattern.permute.xlu0 2
      %478 = vperm.xlu0 %477, %v386
      %v479 = vpop.permute.xlu0 %478
      %481 = vset.pattern.permute.xlu0 2
      %482 = vperm.xlu0 %481, %v387
      %v483 = vpop.permute.xlu0 %482
      %485 = vset.pattern.permute.xlu0 2
      %486 = vperm.xlu0 %485, %v388
      %v487 = vpop.permute.xlu0 %486
      %v489 = vmul.f32 %v475, %v350
      %v490 = vmul.f32 %v479, %v350
      %v491 = vmul.f32 %v483, %v350
      %v492 = vmul.f32 %v487, %v350
      %497 = vrot.lane.b32.xlu0 %v489, 127
      %v498 = vpop.permute.xlu0 %497
      %499 = vrot.lane.b32.xlu0 %v490, 127
      %v500 = vpop.permute.xlu0 %499
      %501 = vrot.lane.b32.xlu0 %v491, 127
      %v502 = vpop.permute.xlu0 %501
      %503 = vrot.lane.b32.xlu0 %v492, 127
      %v504 = vpop.permute.xlu0 %503
      %v509 = vadd.f32 %v469, %v498
      %v510 = vadd.f32 %v470, %v500
      %v511 = vadd.f32 %v471, %v502
      %v512 = vadd.f32 %v472, %v504
      %513 = vset.pattern.permute.xlu0 3
      %514 = vperm.xlu0 %513, %v385
      %v515 = vpop.permute.xlu0 %514
      %517 = vset.pattern.permute.xlu0 3
      %518 = vperm.xlu0 %517, %v386
      %v519 = vpop.permute.xlu0 %518
      %521 = vset.pattern.permute.xlu0 3
      %522 = vperm.xlu0 %521, %v387
      %v523 = vpop.permute.xlu0 %522
      %525 = vset.pattern.permute.xlu0 3
      %526 = vperm.xlu0 %525, %v388
      %v527 = vpop.permute.xlu0 %526
      %v529 = vmul.f32 %v515, %v375
      %v530 = vmul.f32 %v519, %v375
      %v531 = vmul.f32 %v523, %v375
      %v532 = vmul.f32 %v527, %v375
      %537 = vrot.lane.b32.xlu0 %v529, 127
      %v538 = vpop.permute.xlu0 %537
      %539 = vrot.lane.b32.xlu0 %v530, 127
      %v540 = vpop.permute.xlu0 %539
      %541 = vrot.lane.b32.xlu0 %v531, 127
      %v542 = vpop.permute.xlu0 %541
      %543 = vrot.lane.b32.xlu0 %v532, 127
      %v544 = vpop.permute.xlu0 %543
      %v549 = vadd.f32 %v509, %v538
      %v550 = vadd.f32 %v510, %v540
      %v551 = vadd.f32 %v511, %v542
      %v552 = vadd.f32 %v512, %v544
      %s553 = scalar_lea.vmem %s1, 64
      %v554 = vld [vmem:[%s553] sm:$0xff]
      %v555 = vld [vmem:[%s553 + $0x8] sm:$0xff]
      %v556 = vld [vmem:[%s553 + $0x10] sm:$0xff]
      %v557 = vld [vmem:[%s553 + $0x18] sm:$0xff]
      %559 = vset.pattern.permute.xlu0 0
      %560 = vperm.xlu0 %559, %v554
      %v561 = vpop.permute.xlu0 %560
      %564 = vset.pattern.permute.xlu0 0
      %565 = vperm.xlu0 %564, %v555
      %v566 = vpop.permute.xlu0 %565
      %569 = vset.pattern.permute.xlu0 0
      %570 = vperm.xlu0 %569, %v556
      %v571 = vpop.permute.xlu0 %570
      %574 = vset.pattern.permute.xlu0 0
      %575 = vperm.xlu0 %574, %v557
      %v576 = vpop.permute.xlu0 %575
      %v578 = vmul.f32 %v561, %v300
      %v579 = vmul.f32 %v566, %v300
      %v580 = vmul.f32 %v571, %v300
      %v581 = vmul.f32 %v576, %v300
      %586 = vrot.lane.b32.xlu0 %v578, 126
      %v587 = vpop.permute.xlu0 %586
      %588 = vrot.lane.b32.xlu0 %v579, 126
      %v589 = vpop.permute.xlu0 %588
      %590 = vrot.lane.b32.xlu0 %v580, 126
      %v591 = vpop.permute.xlu0 %590
      %592 = vrot.lane.b32.xlu0 %v581, 126
      %v593 = vpop.permute.xlu0 %592
      %v598 = vadd.f32 %v549, %v587
      %v599 = vadd.f32 %v550, %v589
      %v600 = vadd.f32 %v551, %v591
      %v601 = vadd.f32 %v552, %v593
      %602 = vset.pattern.permute.xlu0 1
      %603 = vperm.xlu0 %602, %v554
      %v604 = vpop.permute.xlu0 %603
      %606 = vset.pattern.permute.xlu0 1
      %607 = vperm.xlu0 %606, %v555
      %v608 = vpop.permute.xlu0 %607
      %610 = vset.pattern.permute.xlu0 1
      %611 = vperm.xlu0 %610, %v556
      %v612 = vpop.permute.xlu0 %611
      %614 = vset.pattern.permute.xlu0 1
      %615 = vperm.xlu0 %614, %v557
      %v616 = vpop.permute.xlu0 %615
      %v618 = vmul.f32 %v604, %v325
      %v619 = vmul.f32 %v608, %v325
      %v620 = vmul.f32 %v612, %v325
      %v621 = vmul.f32 %v616, %v325
      %626 = vrot.lane.b32.xlu0 %v618, 126
      %v627 = vpop.permute.xlu0 %626
      %628 = vrot.lane.b32.xlu0 %v619, 126
      %v629 = vpop.permute.xlu0 %628
      %630 = vrot.lane.b32.xlu0 %v620, 126
      %v631 = vpop.permute.xlu0 %630
      %632 = vrot.lane.b32.xlu0 %v621, 126
      %v633 = vpop.permute.xlu0 %632
      %v638 = vadd.f32 %v598, %v627
      %v639 = vadd.f32 %v599, %v629
      %v640 = vadd.f32 %v600, %v631
      %v641 = vadd.f32 %v601, %v633
      %642 = vset.pattern.permute.xlu0 2
      %643 = vperm.xlu0 %642, %v554
      %v644 = vpop.permute.xlu0 %643
      %646 = vset.pattern.permute.xlu0 2
      %647 = vperm.xlu0 %646, %v555
      %v648 = vpop.permute.xlu0 %647
      %650 = vset.pattern.permute.xlu0 2
      %651 = vperm.xlu0 %650, %v556
      %v652 = vpop.permute.xlu0 %651
      %654 = vset.pattern.permute.xlu0 2
      %655 = vperm.xlu0 %654, %v557
      %v656 = vpop.permute.xlu0 %655
      %v658 = vmul.f32 %v644, %v350
      %v659 = vmul.f32 %v648, %v350
      %v660 = vmul.f32 %v652, %v350
      %v661 = vmul.f32 %v656, %v350
      %666 = vrot.lane.b32.xlu0 %v658, 126
      %v667 = vpop.permute.xlu0 %666
      %668 = vrot.lane.b32.xlu0 %v659, 126
      %v669 = vpop.permute.xlu0 %668
      %670 = vrot.lane.b32.xlu0 %v660, 126
      %v671 = vpop.permute.xlu0 %670
      %672 = vrot.lane.b32.xlu0 %v661, 126
      %v673 = vpop.permute.xlu0 %672
      %v678 = vadd.f32 %v638, %v667
      %v679 = vadd.f32 %v639, %v669
      %v680 = vadd.f32 %v640, %v671
      %v681 = vadd.f32 %v641, %v673
      %682 = vset.pattern.permute.xlu0 3
      %683 = vperm.xlu0 %682, %v554
      %v684 = vpop.permute.xlu0 %683
      %686 = vset.pattern.permute.xlu0 3
      %687 = vperm.xlu0 %686, %v555
      %v688 = vpop.permute.xlu0 %687
      %690 = vset.pattern.permute.xlu0 3
      %691 = vperm.xlu0 %690, %v556
      %v692 = vpop.permute.xlu0 %691
      %694 = vset.pattern.permute.xlu0 3
      %695 = vperm.xlu0 %694, %v557
      %v696 = vpop.permute.xlu0 %695
      %v698 = vmul.f32 %v684, %v375
      %v699 = vmul.f32 %v688, %v375
      %v700 = vmul.f32 %v692, %v375
      %v701 = vmul.f32 %v696, %v375
      %706 = vrot.lane.b32.xlu0 %v698, 126
      %v707 = vpop.permute.xlu0 %706
      %708 = vrot.lane.b32.xlu0 %v699, 126
      %v709 = vpop.permute.xlu0 %708
      %710 = vrot.lane.b32.xlu0 %v700, 126
      %v711 = vpop.permute.xlu0 %710
      %712 = vrot.lane.b32.xlu0 %v701, 126
      %v713 = vpop.permute.xlu0 %712
      %v718 = vadd.f32 %v678, %v707
      %v719 = vadd.f32 %v679, %v709
      %v720 = vadd.f32 %v680, %v711
      %v721 = vadd.f32 %v681, %v713
      %vm722 = vcmask 125952
      %v723 = vsel %vm722, %v718, 0.0
      %724 = vadd.xlane.f32.xlu0 %v723
      %v725 = vpop.xlane.xlu0 %724
      %v726 = vrot.slane %v725, 4
      %v727 = vadd.f32 %v725, %v726
      %v728 = vrot.slane %v727, 2
      %v729 = vadd.f32 %v727, %v728
      %v730 = vrot.slane %v729, 1
      %v731 = vadd.f32 %v729, %v730
      %s732 = vtos %v731
      %s733 = smul.f32 %s732, 0.015625
      %v734 = vstv %s733
      %v735 = vsub.f32 %v718, %v734
      %v736 = vmul.f32 %v735, %v735
      %v737 = vsel %vm722, %v736, 0.0
      %738 = vadd.xlane.f32.xlu0 %v737
      %v739 = vpop.xlane.xlu0 %738
      %v740 = vrot.slane %v739, 4
      %v741 = vadd.f32 %v739, %v740
      %v742 = vrot.slane %v741, 2
      %v743 = vadd.f32 %v741, %v742
      %v744 = vrot.slane %v743, 1
      %v745 = vadd.f32 %v743, %v744
      %s746 = vtos %v745
      %s747 = smul.f32 %s746, 0.015625
      %s748 = sadd.f32 %s747, 1e-05
      %v749 = vstv %s748
      %v750 = vrsqrt.pop %v749
      %v751 = vmul.f32 %v750, %v749
      %v752 = vmul.f32 %v751, %v750
      %v753 = vmul.f32 0.5, %v752
      %v754 = vsub.f32 1.5, %v753
      %v755 = vmul.f32 %v750, %v754
      %vm756 = vweird.f32 %v749
      %vm757 = vweird.f32 %v750
      %vm758 = vmor %vm756, %vm757
      %v759 = vsel %vm758, %v750, %v755
      %s760 = vtos %v759
      %v761 = vld [vmem:[%s3] sm:$0xf]
      %v762 = vstv %s760
      %v763 = vmul.f32 %v762, %v761
      %765 = vset.pattern.permute.xlu0 0
      %766 = vperm.xlu0 %765, %v763
      %v767 = vpop.permute.xlu0 %766
      %v769 = vmul.f32 %v735, %v767
      %v770 = vld [vmem:[%s4] sm:$0xf]
      %772 = vset.pattern.permute.xlu0 0
      %773 = vperm.xlu0 %772, %v770
      %v774 = vpop.permute.xlu0 %773
      %v776 = vadd.f32 %v769, %v774
      %v777 = vmax.f32 %v776, 0.0
      %v778 = vmin.f32 %v776, 0.0
      %v779 = vstv %s251
      %v780 = vmul.f32 %v779, %v778
      %v781 = vadd.f32 %v777, %v780
      %782 = vst.msk [vmem:[%s249] sm:$0xf] %vm722, %v781
      %v784 = vrot.slane %v718, 4
      %v786 = vsel %vm722, %v784, 0.0
      %787 = vadd.xlane.f32.xlu0 %v786
      %v788 = vpop.xlane.xlu0 %787
      %v789 = vrot.slane %v788, 4
      %v790 = vadd.f32 %v788, %v789
      %v791 = vrot.slane %v790, 2
      %v792 = vadd.f32 %v790, %v791
      %v793 = vrot.slane %v792, 1
      %v794 = vadd.f32 %v792, %v793
      %s795 = vtos %v794
      %s796 = smul.f32 %s795, 0.015625
      %v797 = vstv %s796
      %v798 = vsub.f32 %v718, %v797
      %v799 = vmul.f32 %v798, %v798
      %v801 = vrot.slane %v799, 4
      %v803 = vsel %vm722, %v801, 0.0
      %804 = vadd.xlane.f32.xlu0 %v803
      %v805 = vpop.xlane.xlu0 %804
      %v806 = vrot.slane %v805, 4
      %v807 = vadd.f32 %v805, %v806
      %v808 = vrot.slane %v807, 2
      %v809 = vadd.f32 %v807, %v808
      %v810 = vrot.slane %v809, 1
      %v811 = vadd.f32 %v809, %v810
      %s812 = vtos %v811
      %s813 = smul.f32 %s812, 0.015625
      %s814 = sadd.f32 %s813, 1e-05
      %v815 = vstv %s814
      %v816 = vrsqrt.pop %v815
      %v817 = vmul.f32 %v816, %v815
      %v818 = vmul.f32 %v817, %v816
      %v819 = vmul.f32 0.5, %v818
      %v820 = vsub.f32 1.5, %v819
      %v821 = vmul.f32 %v816, %v820
      %vm822 = vweird.f32 %v815
      %vm823 = vweird.f32 %v816
      %vm824 = vmor %vm822, %vm823
      %v825 = vsel %vm824, %v816, %v821
      %s826 = vtos %v825
      %v827 = vld [vmem:[%s3 + $0x4] sm:$0xf]
      %v828 = vstv %s826
      %v829 = vmul.f32 %v828, %v827
      %831 = vset.pattern.permute.xlu0 0
      %832 = vperm.xlu0 %831, %v829
      %v833 = vpop.permute.xlu0 %832
      %v834 = vrot.slane %v833, 4
      %v836 = vmul.f32 %v798, %v834
      %v837 = vld [vmem:[%s4 + $0x4] sm:$0xf]
      %839 = vset.pattern.permute.xlu0 0
      %840 = vperm.xlu0 %839, %v837
      %v841 = vpop.permute.xlu0 %840
      %v842 = vrot.slane %v841, 4
      %v844 = vadd.f32 %v836, %v842
      %v845 = vmax.f32 %v844, 0.0
      %v846 = vmin.f32 %v844, 0.0
      %v847 = vmul.f32 %v779, %v846
      %v848 = vadd.f32 %v845, %v847
      %vm849 = vcmask 130052
      %850 = vst.msk [vmem:[%s249] sm:$0xf0] %vm849, %v848
      %v851 = vsel %vm722, %v719, 0.0
      %852 = vadd.xlane.f32.xlu0 %v851
      %v853 = vpop.xlane.xlu0 %852
      %v854 = vrot.slane %v853, 4
      %v855 = vadd.f32 %v853, %v854
      %v856 = vrot.slane %v855, 2
      %v857 = vadd.f32 %v855, %v856
      %v858 = vrot.slane %v857, 1
      %v859 = vadd.f32 %v857, %v858
      %s860 = vtos %v859
      %s861 = smul.f32 %s860, 0.015625
      %v862 = vstv %s861
      %v863 = vsub.f32 %v719, %v862
      %v864 = vmul.f32 %v863, %v863
      %v865 = vsel %vm722, %v864, 0.0
      %866 = vadd.xlane.f32.xlu0 %v865
      %v867 = vpop.xlane.xlu0 %866
      %v868 = vrot.slane %v867, 4
      %v869 = vadd.f32 %v867, %v868
      %v870 = vrot.slane %v869, 2
      %v871 = vadd.f32 %v869, %v870
      %v872 = vrot.slane %v871, 1
      %v873 = vadd.f32 %v871, %v872
      %s874 = vtos %v873
      %s875 = smul.f32 %s874, 0.015625
      %s876 = sadd.f32 %s875, 1e-05
      %v877 = vstv %s876
      %v878 = vrsqrt.pop %v877
      %v879 = vmul.f32 %v878, %v877
      %v880 = vmul.f32 %v879, %v878
      %v881 = vmul.f32 0.5, %v880
      %v882 = vsub.f32 1.5, %v881
      %v883 = vmul.f32 %v878, %v882
      %vm884 = vweird.f32 %v877
      %vm885 = vweird.f32 %v878
      %vm886 = vmor %vm884, %vm885
      %v887 = vsel %vm886, %v878, %v883
      %s888 = vtos %v887
      %v889 = vld [vmem:[%s3 + $0x8] sm:$0xf]
      %v890 = vstv %s888
      %v891 = vmul.f32 %v890, %v889
      %893 = vset.pattern.permute.xlu0 0
      %894 = vperm.xlu0 %893, %v891
      %v895 = vpop.permute.xlu0 %894
      %v897 = vmul.f32 %v863, %v895
      %v898 = vld [vmem:[%s4 + $0x8] sm:$0xf]
      %900 = vset.pattern.permute.xlu0 0
      %901 = vperm.xlu0 %900, %v898
      %v902 = vpop.permute.xlu0 %901
      %v904 = vadd.f32 %v897, %v902
      %v905 = vmax.f32 %v904, 0.0
      %v906 = vmin.f32 %v904, 0.0
      %v907 = vmul.f32 %v779, %v906
      %v908 = vadd.f32 %v905, %v907
      %909 = vst.msk [vmem:[%s249 + $0x8] sm:$0xf] %vm722, %v908
      %v911 = vrot.slane %v719, 4
      %v913 = vsel %vm722, %v911, 0.0
      %914 = vadd.xlane.f32.xlu0 %v913
      %v915 = vpop.xlane.xlu0 %914
      %v916 = vrot.slane %v915, 4
      %v917 = vadd.f32 %v915, %v916
      %v918 = vrot.slane %v917, 2
      %v919 = vadd.f32 %v917, %v918
      %v920 = vrot.slane %v919, 1
      %v921 = vadd.f32 %v919, %v920
      %s922 = vtos %v921
      %s923 = smul.f32 %s922, 0.015625
      %v924 = vstv %s923
      %v925 = vsub.f32 %v719, %v924
      %v926 = vmul.f32 %v925, %v925
      %v928 = vrot.slane %v926, 4
      %v930 = vsel %vm722, %v928, 0.0
      %931 = vadd.xlane.f32.xlu0 %v930
      %v932 = vpop.xlane.xlu0 %931
      %v933 = vrot.slane %v932, 4
      %v934 = vadd.f32 %v932, %v933
      %v935 = vrot.slane %v934, 2
      %v936 = vadd.f32 %v934, %v935
      %v937 = vrot.slane %v936, 1
      %v938 = vadd.f32 %v936, %v937
      %s939 = vtos %v938
      %s940 = smul.f32 %s939, 0.015625
      %s941 = sadd.f32 %s940, 1e-05
      %v942 = vstv %s941
      %v943 = vrsqrt.pop %v942
      %v944 = vmul.f32 %v943, %v942
      %v945 = vmul.f32 %v944, %v943
      %v946 = vmul.f32 0.5, %v945
      %v947 = vsub.f32 1.5, %v946
      %v948 = vmul.f32 %v943, %v947
      %vm949 = vweird.f32 %v942
      %vm950 = vweird.f32 %v943
      %vm951 = vmor %vm949, %vm950
      %v952 = vsel %vm951, %v943, %v948
      %s953 = vtos %v952
      %v954 = vld [vmem:[%s3 + $0xc] sm:$0xf]
      %v955 = vstv %s953
      %v956 = vmul.f32 %v955, %v954
      %958 = vset.pattern.permute.xlu0 0
      %959 = vperm.xlu0 %958, %v956
      %v960 = vpop.permute.xlu0 %959
      %v961 = vrot.slane %v960, 4
      %v963 = vmul.f32 %v925, %v961
      %v964 = vld [vmem:[%s4 + $0xc] sm:$0xf]
      %966 = vset.pattern.permute.xlu0 0
      %967 = vperm.xlu0 %966, %v964
      %v968 = vpop.permute.xlu0 %967
      %v969 = vrot.slane %v968, 4
      %v971 = vadd.f32 %v963, %v969
      %v972 = vmax.f32 %v971, 0.0
      %v973 = vmin.f32 %v971, 0.0
      %v974 = vmul.f32 %v779, %v973
      %v975 = vadd.f32 %v972, %v974
      %976 = vst.msk [vmem:[%s249 + $0x8] sm:$0xf0] %vm849, %v975
      %v977 = vsel %vm722, %v720, 0.0
      %978 = vadd.xlane.f32.xlu0 %v977
      %v979 = vpop.xlane.xlu0 %978
      %v980 = vrot.slane %v979, 4
      %v981 = vadd.f32 %v979, %v980
      %v982 = vrot.slane %v981, 2
      %v983 = vadd.f32 %v981, %v982
      %v984 = vrot.slane %v983, 1
      %v985 = vadd.f32 %v983, %v984
      %s986 = vtos %v985
      %s987 = smul.f32 %s986, 0.015625
      %v988 = vstv %s987
      %v989 = vsub.f32 %v720, %v988
      %v990 = vmul.f32 %v989, %v989
      %v991 = vsel %vm722, %v990, 0.0
      %992 = vadd.xlane.f32.xlu0 %v991
      %v993 = vpop.xlane.xlu0 %992
      %v994 = vrot.slane %v993, 4
      %v995 = vadd.f32 %v993, %v994
      %v996 = vrot.slane %v995, 2
      %v997 = vadd.f32 %v995, %v996
      %v998 = vrot.slane %v997, 1
      %v999 = vadd.f32 %v997, %v998
      %s1000 = vtos %v999
      %s1001 = smul.f32 %s1000, 0.015625
      %s1002 = sadd.f32 %s1001, 1e-05
      %v1003 = vstv %s1002
      %v1004 = vrsqrt.pop %v1003
      %v1005 = vmul.f32 %v1004, %v1003
      %v1006 = vmul.f32 %v1005, %v1004
      %v1007 = vmul.f32 0.5, %v1006
      %v1008 = vsub.f32 1.5, %v1007
      %v1009 = vmul.f32 %v1004, %v1008
      %vm1010 = vweird.f32 %v1003
      %vm1011 = vweird.f32 %v1004
      %vm1012 = vmor %vm1010, %vm1011
      %v1013 = vsel %vm1012, %v1004, %v1009
      %s1014 = vtos %v1013
      %v1015 = vld [vmem:[%s3 + $0x10] sm:$0xf]
      %v1016 = vstv %s1014
      %v1017 = vmul.f32 %v1016, %v1015
      %1019 = vset.pattern.permute.xlu0 0
      %1020 = vperm.xlu0 %1019, %v1017
      %v1021 = vpop.permute.xlu0 %1020
      %v1023 = vmul.f32 %v989, %v1021
      %v1024 = vld [vmem:[%s4 + $0x10] sm:$0xf]
      %1026 = vset.pattern.permute.xlu0 0
      %1027 = vperm.xlu0 %1026, %v1024
      %v1028 = vpop.permute.xlu0 %1027
      %v1030 = vadd.f32 %v1023, %v1028
      %v1031 = vmax.f32 %v1030, 0.0
      %v1032 = vmin.f32 %v1030, 0.0
      %v1033 = vmul.f32 %v779, %v1032
      %v1034 = vadd.f32 %v1031, %v1033
      %1035 = vst.msk [vmem:[%s249 + $0x10] sm:$0xf] %vm722, %v1034
      %v1037 = vrot.slane %v720, 4
      %v1039 = vsel %vm722, %v1037, 0.0
      %1040 = vadd.xlane.f32.xlu0 %v1039
      %v1041 = vpop.xlane.xlu0 %1040
      %v1042 = vrot.slane %v1041, 4
      %v1043 = vadd.f32 %v1041, %v1042
      %v1044 = vrot.slane %v1043, 2
      %v1045 = vadd.f32 %v1043, %v1044
      %v1046 = vrot.slane %v1045, 1
      %v1047 = vadd.f32 %v1045, %v1046
      %s1048 = vtos %v1047
      %s1049 = smul.f32 %s1048, 0.015625
      %v1050 = vstv %s1049
      %v1051 = vsub.f32 %v720, %v1050
      %v1052 = vmul.f32 %v1051, %v1051
      %v1054 = vrot.slane %v1052, 4
      %v1056 = vsel %vm722, %v1054, 0.0
      %1057 = vadd.xlane.f32.xlu0 %v1056
      %v1058 = vpop.xlane.xlu0 %1057
      %v1059 = vrot.slane %v1058, 4
      %v1060 = vadd.f32 %v1058, %v1059
      %v1061 = vrot.slane %v1060, 2
      %v1062 = vadd.f32 %v1060, %v1061
      %v1063 = vrot.slane %v1062, 1
      %v1064 = vadd.f32 %v1062, %v1063
      %s1065 = vtos %v1064
      %s1066 = smul.f32 %s1065, 0.015625
      %s1067 = sadd.f32 %s1066, 1e-05
      %v1068 = vstv %s1067
      %v1069 = vrsqrt.pop %v1068
      %v1070 = vmul.f32 %v1069, %v1068
      %v1071 = vmul.f32 %v1070, %v1069
      %v1072 = vmul.f32 0.5, %v1071
      %v1073 = vsub.f32 1.5, %v1072
      %v1074 = vmul.f32 %v1069, %v1073
      %vm1075 = vweird.f32 %v1068
      %vm1076 = vweird.f32 %v1069
      %vm1077 = vmor %vm1075, %vm1076
      %v1078 = vsel %vm1077, %v1069, %v1074
      %s1079 = vtos %v1078
      %v1080 = vld [vmem:[%s3 + $0x14] sm:$0xf]
      %v1081 = vstv %s1079
      %v1082 = vmul.f32 %v1081, %v1080
      %1084 = vset.pattern.permute.xlu0 0
      %1085 = vperm.xlu0 %1084, %v1082
      %v1086 = vpop.permute.xlu0 %1085
      %v1087 = vrot.slane %v1086, 4
      %v1089 = vmul.f32 %v1051, %v1087
      %v1090 = vld [vmem:[%s4 + $0x14] sm:$0xf]
      %1092 = vset.pattern.permute.xlu0 0
      %1093 = vperm.xlu0 %1092, %v1090
      %v1094 = vpop.permute.xlu0 %1093
      %v1095 = vrot.slane %v1094, 4
      %v1097 = vadd.f32 %v1089, %v1095
      %v1098 = vmax.f32 %v1097, 0.0
      %v1099 = vmin.f32 %v1097, 0.0
      %v1100 = vmul.f32 %v779, %v1099
      %v1101 = vadd.f32 %v1098, %v1100
      %1102 = vst.msk [vmem:[%s249 + $0x10] sm:$0xf0] %vm849, %v1101
      %v1103 = vsel %vm722, %v721, 0.0
      %1104 = vadd.xlane.f32.xlu0 %v1103
      %v1105 = vpop.xlane.xlu0 %1104
      %v1106 = vrot.slane %v1105, 4
      %v1107 = vadd.f32 %v1105, %v1106
      %v1108 = vrot.slane %v1107, 2
      %v1109 = vadd.f32 %v1107, %v1108
      %v1110 = vrot.slane %v1109, 1
      %v1111 = vadd.f32 %v1109, %v1110
      %s1112 = vtos %v1111
      %s1113 = smul.f32 %s1112, 0.015625
      %v1114 = vstv %s1113
      %v1115 = vsub.f32 %v721, %v1114
      %v1116 = vmul.f32 %v1115, %v1115
      %v1117 = vsel %vm722, %v1116, 0.0
      %1118 = vadd.xlane.f32.xlu0 %v1117
      %v1119 = vpop.xlane.xlu0 %1118
      %v1120 = vrot.slane %v1119, 4
      %v1121 = vadd.f32 %v1119, %v1120
      %v1122 = vrot.slane %v1121, 2
      %v1123 = vadd.f32 %v1121, %v1122
      %v1124 = vrot.slane %v1123, 1
      %v1125 = vadd.f32 %v1123, %v1124
      %s1126 = vtos %v1125
      %s1127 = smul.f32 %s1126, 0.015625
      %s1128 = sadd.f32 %s1127, 1e-05
      %v1129 = vstv %s1128
      %v1130 = vrsqrt.pop %v1129
      %v1131 = vmul.f32 %v1130, %v1129
      %v1132 = vmul.f32 %v1131, %v1130
      %v1133 = vmul.f32 0.5, %v1132
      %v1134 = vsub.f32 1.5, %v1133
      %v1135 = vmul.f32 %v1130, %v1134
      %vm1136 = vweird.f32 %v1129
      %vm1137 = vweird.f32 %v1130
      %vm1138 = vmor %vm1136, %vm1137
      %v1139 = vsel %vm1138, %v1130, %v1135
      %s1140 = vtos %v1139
      %v1141 = vld [vmem:[%s3 + $0x18] sm:$0xf]
      %v1142 = vstv %s1140
      %v1143 = vmul.f32 %v1142, %v1141
      %1145 = vset.pattern.permute.xlu0 0
      %1146 = vperm.xlu0 %1145, %v1143
      %v1147 = vpop.permute.xlu0 %1146
      %v1149 = vmul.f32 %v1115, %v1147
      %v1150 = vld [vmem:[%s4 + $0x18] sm:$0xf]
      %1152 = vset.pattern.permute.xlu0 0
      %1153 = vperm.xlu0 %1152, %v1150
      %v1154 = vpop.permute.xlu0 %1153
      %v1156 = vadd.f32 %v1149, %v1154
      %v1157 = vmax.f32 %v1156, 0.0
      %v1158 = vmin.f32 %v1156, 0.0
      %v1159 = vmul.f32 %v779, %v1158
      %v1160 = vadd.f32 %v1157, %v1159
      %1161 = vst.msk [vmem:[%s249 + $0x18] sm:$0xf] %vm722, %v1160
      %v1163 = vrot.slane %v721, 4
      %v1165 = vsel %vm722, %v1163, 0.0
      %1166 = vadd.xlane.f32.xlu0 %v1165
      %v1167 = vpop.xlane.xlu0 %1166
      %v1168 = vrot.slane %v1167, 4
      %v1169 = vadd.f32 %v1167, %v1168
      %v1170 = vrot.slane %v1169, 2
      %v1171 = vadd.f32 %v1169, %v1170
      %v1172 = vrot.slane %v1171, 1
      %v1173 = vadd.f32 %v1171, %v1172
      %s1174 = vtos %v1173
      %s1175 = smul.f32 %s1174, 0.015625
      %v1176 = vstv %s1175
      %v1177 = vsub.f32 %v721, %v1176
      %v1178 = vmul.f32 %v1177, %v1177
      %v1180 = vrot.slane %v1178, 4
      %v1182 = vsel %vm722, %v1180, 0.0
      %1183 = vadd.xlane.f32.xlu0 %v1182
      %v1184 = vpop.xlane.xlu0 %1183
      %v1185 = vrot.slane %v1184, 4
      %v1186 = vadd.f32 %v1184, %v1185
      %v1187 = vrot.slane %v1186, 2
      %v1188 = vadd.f32 %v1186, %v1187
      %v1189 = vrot.slane %v1188, 1
      %v1190 = vadd.f32 %v1188, %v1189
      %s1191 = vtos %v1190
      %s1192 = smul.f32 %s1191, 0.015625
      %s1193 = sadd.f32 %s1192, 1e-05
      %v1194 = vstv %s1193
      %v1195 = vrsqrt.pop %v1194
      %v1196 = vmul.f32 %v1195, %v1194
      %v1197 = vmul.f32 %v1196, %v1195
      %v1198 = vmul.f32 0.5, %v1197
      %v1199 = vsub.f32 1.5, %v1198
      %v1200 = vmul.f32 %v1195, %v1199
      %vm1201 = vweird.f32 %v1194
      %vm1202 = vweird.f32 %v1195
      %vm1203 = vmor %vm1201, %vm1202
      %v1204 = vsel %vm1203, %v1195, %v1200
      %s1205 = vtos %v1204
      %v1206 = vld [vmem:[%s3 + $0x1c] sm:$0xf]
      %v1207 = vstv %s1205
      %v1208 = vmul.f32 %v1207, %v1206
      %1210 = vset.pattern.permute.xlu0 0
      %1211 = vperm.xlu0 %1210, %v1208
      %v1212 = vpop.permute.xlu0 %1211
      %v1213 = vrot.slane %v1212, 4
      %v1215 = vmul.f32 %v1177, %v1213
      %v1216 = vld [vmem:[%s4 + $0x1c] sm:$0xf]
      %1218 = vset.pattern.permute.xlu0 0
      %1219 = vperm.xlu0 %1218, %v1216
      %v1220 = vpop.permute.xlu0 %1219
      %v1221 = vrot.slane %v1220, 4
      %v1223 = vadd.f32 %v1215, %v1221
      %v1224 = vmax.f32 %v1223, 0.0
      %v1225 = vmin.f32 %v1223, 0.0
      %v1226 = vmul.f32 %v779, %v1225
      %v1227 = vadd.f32 %v1224, %v1226
      %1228 = vst.msk [vmem:[%s249 + $0x18] sm:$0xf0] %vm849, %v1227
      %p1229 = scmp.lt.s32.totalorder %s18, 1
      %s1230 = scalar_select %p1229, %s18, 1
      %s1231 = smul.addr %s1230, 4
      %s1232 = smul.addr %s1231, 8
      %s1233 = scalar_lea.vmem %s6, %s1232
      // Predicated region
      $region45: #{tpu_custom_call.1} parent=43 // pred_check
        %p1234 = pneg %p167
      $region46: #{tpu_custom_call.1} parent=43 // pred_check_branch
        %1236 = sbr.rel (%p1234) target = $region48
      $region47: #{tpu_custom_call.1} parent=43 // pred_region
        _
      $region48: #{tpu_custom_call.1} parent=43 // pred_fallthru
        _
    $region44: #{tpu_custom_call.1} parent=5 // pred_fallthru
      _
    %p1237 = scmp.le.s32.totalorder 2, %s13
    // Predicated region
    $region49: #{tpu_custom_call.1} parent=5 // pred_check
      %p1238 = pneg %p1237
    $region50: #{tpu_custom_call.1} parent=5 // pred_check_branch
      %1240 = sbr.rel (%p1238) target = $region52
    $region51: #{tpu_custom_call.1} parent=5 // pred_region
      %s1241 = ssub.s32 %s13, 2
      // Predicated region
      $region53: #{tpu_custom_call.1} parent=51 // pred_check
        %p1242 = pneg %p173
      $region54: #{tpu_custom_call.1} parent=51 // pred_check_branch
        %1244 = sbr.rel (%p1242) target = $region56
      $region55: #{tpu_custom_call.1} parent=51 // pred_region
        %p1245 = scmp.lt.s32.totalorder %s19, 1
        %s1246 = scalar_select %p1245, %s19, 1
        %s1247 = smul.addr %s1246, 4
        %s1248 = smul.addr %s1247, 8
        %s1249 = scalar_lea.vmem %s6, %s1248
      $region56: #{tpu_custom_call.1} parent=51 // pred_fallthru
        _
    $region52: #{tpu_custom_call.1} parent=5 // pred_fallthru
      _
  $region6: #{tpu_custom_call.1} parent=0 // loop_footer
    %s17 = sadd.s32 1, %s13
  $region7: #{tpu_custom_call.1} parent=0 // loop_footer_branch
    %12 = sbr.rel target = $region3
  $region8: #{tpu_custom_call.1} parent=0 // loop_exit
    _

</llo_original>
